<compile_context>
chip_gen: v7x
topology: tpu7x:2x2x1
jax: 0.10.0
libtpu: 0.0.40
codegen_flags: <defaults>
</compile_context>

<pallas_src>
import jax
import jax.numpy as jnp
from jax import lax
from jax.experimental import pallas as pl
from jax.experimental.pallas import tpu as pltpu


def coattention_kernel(q_ref, v_ref, wb_ref, wv_ref, wq_ref, whv_ref, whq_ref,
                       out_ref):
    """Parallel co-attention for a block of Bb batch elements.

    q_ref  : [Bb, T, D]    wb_ref : [D, D]     whv_ref: [1, k]
    v_ref  : [Bb, N, D]    wv_ref : [k, D]     whq_ref: [1, k]
                           wq_ref : [k, D]
    out_ref: [Bb, 2, D]  (row 0 = attended question q, row 1 = attended image v)
    """
    Q = q_ref[...]
    V = v_ref[...]
    W_b = wb_ref[...]
    W_v = wv_ref[...]
    W_q = wq_ref[...]
    w_hv = whv_ref[...]          # [1, k]
    w_hq = whq_ref[...]          # [1, k]

    Bb, T, D = Q.shape
    N = V.shape[1]
    k = W_v.shape[0]
    f32 = jnp.float32

    # Flatten batch into the M dimension for the shared-weight matmuls.
    Q2 = Q.reshape(Bb * T, D)
    V2 = V.reshape(Bb * N, D)

    # Reassociated: (Q W_b) first — [Bb*T, D] x [D, D] is a better MXU shape
    # than W_b @ V^T and needs no transpose of V.
    QWb = jnp.dot(Q2, W_b, preferred_element_type=f32).reshape(Bb, T, D)

    # A_q = Q W_q^T, A_v = V W_v^T: contract on D directly (transposed-RHS
    # dot_general), no materialized transposes.
    tr_rhs = (((1,), (1,)), ((), ()))
    A_q = lax.dot_general(Q2, W_q, tr_rhs,
                          preferred_element_type=f32).reshape(Bb, T, k)
    A_v = lax.dot_general(V2, W_v, tr_rhs,
                          preferred_element_type=f32).reshape(Bb, N, k)

    # Affinity matrix in both orientations (avoids materializing C^T; the
    # second contraction is only Bb*T*N*D extra MACs — tiny vs. the W_b matmul):
    #   C [b,t,n] = sum_d (Q W_b)[b,t,d] * V[b,n,d]
    #   Ct[b,n,t] = sum_d V[b,n,d] * (Q W_b)[b,t,d]
    C = jnp.einsum('btd,bnd->btn', QWb, V, preferred_element_type=f32)
    Ct = jnp.einsum('bnd,btd->bnt', V, QWb, preferred_element_type=f32)

    # H_v^T = tanh(V W_v^T + C^T (Q W_q^T))  -> [Bb, N, k]
    # H_q^T = tanh(Q W_q^T + C   (V W_v^T))  -> [Bb, T, k]
    HvT = jnp.tanh(A_v + jnp.einsum('bnt,btk->bnk', Ct, A_q,
                                    preferred_element_type=f32))
    HqT = jnp.tanh(A_q + jnp.einsum('btn,bnk->btk', C, A_v,
                                    preferred_element_type=f32))

    # Attention logits: w_h^T H as broadcast-multiply + reduce (VPU/XLU),
    # instead of a degenerate 1 x k MXU matmul.
    s_v = jnp.sum(HvT * w_hv[:, None, :], axis=-1)   # [Bb, N]
    s_q = jnp.sum(HqT * w_hq[:, None, :], axis=-1)   # [Bb, T]

    # Numerically-stable softmax; approx reciprocal rides the idle EUP slot.
    e_v = jnp.exp(s_v - jnp.max(s_v, axis=-1, keepdims=True))
    a_v = e_v * pl.reciprocal(jnp.sum(e_v, axis=-1, keepdims=True), approx=True)
    e_q = jnp.exp(s_q - jnp.max(s_q, axis=-1, keepdims=True))
    a_q = e_q * pl.reciprocal(jnp.sum(e_q, axis=-1, keepdims=True), approx=True)

    # Attended features: multiply + reduce over the attended axis.
    q_att = jnp.sum(a_q[:, :, None] * Q, axis=1)     # [Bb, D]
    v_att = jnp.sum(a_v[:, :, None] * V, axis=1)     # [Bb, D]

    out_ref[:, 0:1, :] = q_att[:, None, :]
    out_ref[:, 1:2, :] = v_att[:, None, :]


def coattention_forward(user_emb, item_emb, params, *, block_b=None):
    B, T, D = user_emb.shape
    _, N, _ = item_emb.shape
    k = params["W_v"].shape[0]

    if block_b is None:
        # Fold as many batch elements per grid step as possible while keeping
        # >= 2 grid steps (when possible) so both v7x TensorCores get work.
        block_b = B if B < 2 else (B // 2 if B % 2 == 0 else 1)
    assert B % block_b == 0, "block_b must divide the batch size"
    grid_b = B // block_b

    # Lane-oriented copies of the [k, 1] attention vectors (free wrapper-side
    # layout plumbing so the kernel never transposes them).
    w_hv = params["w_hv"].reshape(1, k)
    w_hq = params["w_hq"].reshape(1, k)

    out = pl.pallas_call(
        coattention_kernel,
        out_shape=jax.ShapeDtypeStruct((B, 2, D), jnp.float32),
        grid_spec=pltpu.PrefetchScalarGridSpec(
            num_scalar_prefetch=0,
            grid=(grid_b,),
            in_specs=[
                pl.BlockSpec((block_b, T, D), lambda b: (b, 0, 0)),   # Q
                pl.BlockSpec((block_b, N, D), lambda b: (b, 0, 0)),   # V
                # Weights: constant index_map -> loaded once, kept resident.
                pl.BlockSpec((D, D), lambda b: (0, 0)),               # W_b
                pl.BlockSpec((k, D), lambda b: (0, 0)),               # W_v
                pl.BlockSpec((k, D), lambda b: (0, 0)),               # W_q
                pl.BlockSpec((1, k), lambda b: (0, 0)),               # w_hv
                pl.BlockSpec((1, k), lambda b: (0, 0)),               # w_hq
            ],
            out_specs=pl.BlockSpec((block_b, 2, D), lambda b: (b, 0, 0)),
        ),
        compiler_params=pltpu.CompilerParams(
            dimension_semantics=("parallel",)),
    )(user_emb, item_emb, params["W_b"], params["W_v"], params["W_q"],
      w_hv, w_hq)

    # torch.squeeze of [B, 1, D] with B > 1 -> [B, D]
    q_user = out[:, 0, :]
    v_item = out[:, 1, :]
    return q_user, v_item


def coattention_reference(user_emb, item_emb, params):
    """Pure-JAX reference mirroring the PyTorch code, for validation."""
    Q = user_emb                              # [B, T, D]
    Vt = jnp.swapaxes(item_emb, 1, 2)         # [B, D, N]
    W_b, W_v, W_q = params["W_b"], params["W_v"], params["W_q"]
    w_hv, w_hq = params["w_hv"], params["w_hq"]

    C = jnp.matmul(Q, jnp.matmul(W_b, Vt))                            # [B, T, N]
    WvV = jnp.matmul(W_v, Vt)                                         # [B, k, N]
    WqQt = jnp.matmul(W_q, jnp.swapaxes(Q, 1, 2))                     # [B, k, T]
    H_v = jnp.tanh(WvV + jnp.matmul(WqQt, C))                         # [B, k, N]
    H_q = jnp.tanh(WqQt + jnp.matmul(WvV, jnp.swapaxes(C, 1, 2)))     # [B, k, T]
    a_v = jax.nn.softmax(jnp.matmul(w_hv.T, H_v), axis=2)             # [B, 1, N]
    a_q = jax.nn.softmax(jnp.matmul(w_hq.T, H_q), axis=2)             # [B, 1, T]
    v = jnp.squeeze(jnp.matmul(a_v, jnp.swapaxes(Vt, 1, 2)), axis=1)  # [B, D]
    q = jnp.squeeze(jnp.matmul(a_q, Q), axis=1)                       # [B, D]
    return q, v


if __name__ == "__main__":
    # Small shapes consistent with the module's forward; B=8 so the batched
    # kernel runs 2 grid steps of 4 batch elements each.
    B, T, N, D, K = 8, 8, 16, 32, 30

    key = jax.random.PRNGKey(0)
    k_q, k_v, k_wb, k_wv, k_wq, k_hv, k_hq = jax.random.split(key, 7)

    user_emb = jax.random.normal(k_q, (B, T, D), dtype=jnp.float32)
    item_emb = jax.random.normal(k_v, (B, N, D), dtype=jnp.float32)

    # Deterministic parameter init (mirrors the torch.randn shapes in __init__).
    params = {
        "W_b": jax.random.normal(k_wb, (D, D), dtype=jnp.float32),
        "W_v": jax.random.normal(k_wv, (K, D), dtype=jnp.float32),
        "W_q": jax.random.normal(k_wq, (K, D), dtype=jnp.float32),
        "w_hv": jax.random.normal(k_hv, (K, 1), dtype=jnp.float32),
        "w_hq": jax.random.normal(k_hq, (K, 1), dtype=jnp.float32),
    }

    q_user, v_item = coattention_forward(user_emb, item_emb, params)
    jax.block_until_ready((q_user, v_item))

    q_ref, v_ref = coattention_reference(user_emb, item_emb, params)
    assert q_user.shape == (B, D) and v_item.shape == (B, D)
    # Tolerance accounts for the (Q@W_b)@V^T reassociation and approx
    # reciprocal; a wrong formula would be off by O(1).
    assert jnp.allclose(q_user, q_ref, atol=1e-2, rtol=1e-2)
    assert jnp.allclose(v_item, v_ref, atol=1e-2, rtol=1e-2)

    print("KERNEL_OK")
</pallas_src>

<mosaic_0001>
module attributes {stable_mosaic.version = 11 : i64} {
  func.func @coattention_kernel(%arg0: i32, %arg1: memref<4x8x32xf32, #tpu.memory_space<vmem>>, %arg2: memref<4x16x32xf32, #tpu.memory_space<vmem>>, %arg3: memref<32x32xf32, #tpu.memory_space<vmem>>, %arg4: memref<30x32xf32, #tpu.memory_space<vmem>>, %arg5: memref<30x32xf32, #tpu.memory_space<vmem>>, %arg6: memref<1x30xf32, #tpu.memory_space<vmem>>, %arg7: memref<1x30xf32, #tpu.memory_space<vmem>>, %arg8: memref<4x2x32xf32, #tpu.memory_space<vmem>>) attributes {dimension_semantics = [#tpu.dimension_semantics<parallel>], iteration_bounds = array<i64: 2>, scalar_prefetch = 0 : i64, scratch_operands = 0 : i64, tpu.core_type = #tpu.core_type<tc>, window_params = [{transform_indices = @transform_0, window_bounds = array<i64: 4, 8, 32>}, {transform_indices = @transform_1, window_bounds = array<i64: 4, 16, 32>}, {pipeline_mode = #tpu.pipeline_mode<synchronous>, transform_indices = @transform_2, window_bounds = array<i64: 32, 32>}, {pipeline_mode = #tpu.pipeline_mode<synchronous>, transform_indices = @transform_3, window_bounds = array<i64: 30, 32>}, {pipeline_mode = #tpu.pipeline_mode<synchronous>, transform_indices = @transform_4, window_bounds = array<i64: 30, 32>}, {pipeline_mode = #tpu.pipeline_mode<synchronous>, transform_indices = @transform_5, window_bounds = array<i64: 1, 30>}, {pipeline_mode = #tpu.pipeline_mode<synchronous>, transform_indices = @transform_6, window_bounds = array<i64: 1, 30>}, {transform_indices = @transform_7, window_bounds = array<i64: 4, 2, 32>}]} {
    %c0 = arith.constant 0 : index
    %c0_0 = arith.constant 0 : index
    %c0_1 = arith.constant 0 : index
    %0 = vector.load %arg1[%c0, %c0_0, %c0_1] : memref<4x8x32xf32, #tpu.memory_space<vmem>>, vector<4x8x32xf32>
    %c0_2 = arith.constant 0 : index
    %c0_3 = arith.constant 0 : index
    %c0_4 = arith.constant 0 : index
    %1 = vector.load %arg2[%c0_2, %c0_3, %c0_4] : memref<4x16x32xf32, #tpu.memory_space<vmem>>, vector<4x16x32xf32>
    %c0_5 = arith.constant 0 : index
    %c0_6 = arith.constant 0 : index
    %2 = vector.load %arg3[%c0_5, %c0_6] : memref<32x32xf32, #tpu.memory_space<vmem>>, vector<32x32xf32>
    %c0_7 = arith.constant 0 : index
    %c0_8 = arith.constant 0 : index
    %3 = vector.load %arg4[%c0_7, %c0_8] : memref<30x32xf32, #tpu.memory_space<vmem>>, vector<30x32xf32>
    %c0_9 = arith.constant 0 : index
    %c0_10 = arith.constant 0 : index
    %4 = vector.load %arg5[%c0_9, %c0_10] : memref<30x32xf32, #tpu.memory_space<vmem>>, vector<30x32xf32>
    %c0_11 = arith.constant 0 : index
    %c0_12 = arith.constant 0 : index
    %5 = vector.load %arg6[%c0_11, %c0_12] : memref<1x30xf32, #tpu.memory_space<vmem>>, vector<1x30xf32>
    %c0_13 = arith.constant 0 : index
    %c0_14 = arith.constant 0 : index
    %6 = vector.load %arg7[%c0_13, %c0_14] : memref<1x30xf32, #tpu.memory_space<vmem>>, vector<1x30xf32>
    %7 = vector.shape_cast %0 : vector<4x8x32xf32> to vector<32x32xf32>
    %8 = vector.shape_cast %1 : vector<4x16x32xf32> to vector<64x32xf32>
    %cst = arith.constant dense<0.000000e+00> : vector<32x32xf32>
    %9 = tpu.matmul %7, %2, %cst {dimension_numbers = #tpu.dot_dimension_numbers<[1], [0], [0], [1], [0, 0, 1, 1], [], []>} : vector<32x32xf32>, vector<32x32xf32>, vector<32x32xf32> -> vector<32x32xf32>
    %10 = vector.shape_cast %9 : vector<32x32xf32> to vector<4x8x32xf32>
    %cst_15 = arith.constant dense<0.000000e+00> : vector<32x30xf32>
    %11 = tpu.matmul %7, %4, %cst_15 {dimension_numbers = #tpu.dot_dimension_numbers<[1], [1], [0], [0], [0, 0, 1, 0], [], []>} : vector<32x32xf32>, vector<30x32xf32>, vector<32x30xf32> -> vector<32x30xf32>
    %12 = vector.shape_cast %11 : vector<32x30xf32> to vector<4x8x30xf32>
    %cst_16 = arith.constant dense<0.000000e+00> : vector<64x30xf32>
    %13 = tpu.matmul %8, %3, %cst_16 {dimension_numbers = #tpu.dot_dimension_numbers<[1], [1], [0], [0], [0, 0, 1, 0], [], []>} : vector<64x32xf32>, vector<30x32xf32>, vector<64x30xf32> -> vector<64x30xf32>
    %14 = vector.shape_cast %13 : vector<64x30xf32> to vector<4x16x30xf32>
    "tpu.trace_start"() <{level = 10 : i32, message = "btd,bnd->btn"}> : () -> ()
    %cst_17 = arith.constant dense<0.000000e+00> : vector<4x8x16xf32>
    %15 = tpu.matmul %10, %1, %cst_17 {dimension_numbers = #tpu.dot_dimension_numbers<[2], [2], [1], [1], [0, 0, 0, 1, 1, 1], [0], [0]>} : vector<4x8x32xf32>, vector<4x16x32xf32>, vector<4x8x16xf32> -> vector<4x8x16xf32>
    "tpu.trace_stop"() : () -> ()
    "tpu.trace_start"() <{level = 10 : i32, message = "bnd,btd->bnt"}> : () -> ()
    %cst_18 = arith.constant dense<0.000000e+00> : vector<4x16x8xf32>
    %16 = tpu.matmul %1, %10, %cst_18 {dimension_numbers = #tpu.dot_dimension_numbers<[2], [2], [1], [1], [0, 0, 0, 1, 1, 1], [0], [0]>} : vector<4x16x32xf32>, vector<4x8x32xf32>, vector<4x16x8xf32> -> vector<4x16x8xf32>
    "tpu.trace_stop"() : () -> ()
    "tpu.trace_start"() <{level = 10 : i32, message = "bnt,btk->bnk"}> : () -> ()
    %cst_19 = arith.constant dense<0.000000e+00> : vector<4x16x30xf32>
    %17 = tpu.matmul %16, %12, %cst_19 {dimension_numbers = #tpu.dot_dimension_numbers<[2], [1], [1], [2], [0, 0, 0, 1, 1, 2], [0], [0]>} : vector<4x16x8xf32>, vector<4x8x30xf32>, vector<4x16x30xf32> -> vector<4x16x30xf32>
    "tpu.trace_stop"() : () -> ()
    %18 = arith.addf %14, %17 : vector<4x16x30xf32>
    %19 = math.tanh %18 : vector<4x16x30xf32>
    "tpu.trace_start"() <{level = 10 : i32, message = "btn,bnk->btk"}> : () -> ()
    %cst_20 = arith.constant dense<0.000000e+00> : vector<4x8x30xf32>
    %20 = tpu.matmul %15, %14, %cst_20 {dimension_numbers = #tpu.dot_dimension_numbers<[2], [1], [1], [2], [0, 0, 0, 1, 1, 2], [0], [0]>} : vector<4x8x16xf32>, vector<4x16x30xf32>, vector<4x8x30xf32> -> vector<4x8x30xf32>
    "tpu.trace_stop"() : () -> ()
    %21 = arith.addf %12, %20 : vector<4x8x30xf32>
    %22 = math.tanh %21 : vector<4x8x30xf32>
    %23 = vector.shape_cast %5 : vector<1x30xf32> to vector<1x1x30xf32>
    %24 = vector.broadcast %23 : vector<1x1x30xf32> to vector<4x16x30xf32>
    %25 = arith.mulf %19, %24 : vector<4x16x30xf32>
    %cst_21 = arith.constant dense<0.000000e+00> : vector<4x16xf32>
    %26 = vector.multi_reduction <add>, %25, %cst_21 [2] : vector<4x16x30xf32> to vector<4x16xf32>
    %27 = vector.shape_cast %6 : vector<1x30xf32> to vector<1x1x30xf32>
    %28 = vector.broadcast %27 : vector<1x1x30xf32> to vector<4x8x30xf32>
    %29 = arith.mulf %22, %28 : vector<4x8x30xf32>
    %cst_22 = arith.constant dense<0.000000e+00> : vector<4x8xf32>
    %30 = vector.multi_reduction <add>, %29, %cst_22 [2] : vector<4x8x30xf32> to vector<4x8xf32>
    %cst_23 = arith.constant dense<0xFF800000> : vector<4xf32>
    %31 = vector.multi_reduction <maximumf>, %26, %cst_23 [1] : vector<4x16xf32> to vector<4xf32>
    %32 = vector.shape_cast %31 : vector<4xf32> to vector<4x1xf32>
    %33 = vector.broadcast %32 : vector<4x1xf32> to vector<4x16xf32>
    %34 = arith.subf %26, %33 : vector<4x16xf32>
    %35 = math.exp %34 : vector<4x16xf32>
    %cst_24 = arith.constant dense<0.000000e+00> : vector<4xf32>
    %36 = vector.multi_reduction <add>, %35, %cst_24 [1] : vector<4x16xf32> to vector<4xf32>
    %37 = vector.shape_cast %36 : vector<4xf32> to vector<4x1xf32>
    %38 = tpu.reciprocal %37 {approx = true} : vector<4x1xf32> -> vector<4x1xf32>
    %39 = vector.broadcast %38 : vector<4x1xf32> to vector<4x16xf32>
    %40 = arith.mulf %35, %39 : vector<4x16xf32>
    %cst_25 = arith.constant dense<0xFF800000> : vector<4xf32>
    %41 = vector.multi_reduction <maximumf>, %30, %cst_25 [1] : vector<4x8xf32> to vector<4xf32>
    %42 = vector.shape_cast %41 : vector<4xf32> to vector<4x1xf32>
    %43 = vector.broadcast %42 : vector<4x1xf32> to vector<4x8xf32>
    %44 = arith.subf %30, %43 : vector<4x8xf32>
    %45 = math.exp %44 : vector<4x8xf32>
    %cst_26 = arith.constant dense<0.000000e+00> : vector<4xf32>
    %46 = vector.multi_reduction <add>, %45, %cst_26 [1] : vector<4x8xf32> to vector<4xf32>
    %47 = vector.shape_cast %46 : vector<4xf32> to vector<4x1xf32>
    %48 = tpu.reciprocal %47 {approx = true} : vector<4x1xf32> -> vector<4x1xf32>
    %49 = vector.broadcast %48 : vector<4x1xf32> to vector<4x8xf32>
    %50 = arith.mulf %45, %49 : vector<4x8xf32>
    %51 = vector.shape_cast %50 : vector<4x8xf32> to vector<4x8x1xf32>
    %52 = vector.broadcast %51 : vector<4x8x1xf32> to vector<4x8x32xf32>
    %53 = arith.mulf %52, %0 : vector<4x8x32xf32>
    %cst_27 = arith.constant dense<0.000000e+00> : vector<4x32xf32>
    %54 = vector.multi_reduction <add>, %53, %cst_27 [1] : vector<4x8x32xf32> to vector<4x32xf32>
    %55 = vector.shape_cast %40 : vector<4x16xf32> to vector<4x16x1xf32>
    %56 = vector.broadcast %55 : vector<4x16x1xf32> to vector<4x16x32xf32>
    %57 = arith.mulf %56, %1 : vector<4x16x32xf32>
    %cst_28 = arith.constant dense<0.000000e+00> : vector<4x32xf32>
    %58 = vector.multi_reduction <add>, %57, %cst_28 [1] : vector<4x16x32xf32> to vector<4x32xf32>
    %59 = vector.shape_cast %54 : vector<4x32xf32> to vector<4x1x32xf32>
    %c0_29 = arith.constant 0 : index
    %c0_30 = arith.constant 0 : index
    %c0_31 = arith.constant 0 : index
    %60 = vector.load %arg8[%c0_29, %c0_30, %c0_31] : memref<4x2x32xf32, #tpu.memory_space<vmem>>, vector<4x1x32xf32>
    tpu.vector_store %arg8[%c0_29, %c0_30, %c0_31], %59 {strides = array<i32>} : memref<4x2x32xf32, #tpu.memory_space<vmem>>, vector<4x1x32xf32>,
    %61 = vector.shape_cast %58 : vector<4x32xf32> to vector<4x1x32xf32>
    %c0_32 = arith.constant 0 : index
    %c1 = arith.constant 1 : index
    %c0_33 = arith.constant 0 : index
    %62 = vector.load %arg8[%c0_32, %c1, %c0_33] : memref<4x2x32xf32, #tpu.memory_space<vmem>>, vector<4x1x32xf32>
    tpu.vector_store %arg8[%c0_32, %c1, %c0_33], %61 {strides = array<i32>} : memref<4x2x32xf32, #tpu.memory_space<vmem>>, vector<4x1x32xf32>,
    return
  }
  func.func @transform_0(%arg0: i32) -> (i32, i32, i32) {
    %c0_i32 = arith.constant 0 : i32
    %c0_i32_0 = arith.constant 0 : i32
    %c0_i32_1 = arith.constant 0 : i32
    return %arg0, %c0_i32, %c0_i32_0 : i32, i32, i32
  }
  func.func @transform_1(%arg0: i32) -> (i32, i32, i32) {
    %c0_i32 = arith.constant 0 : i32
    %c0_i32_0 = arith.constant 0 : i32
    %c0_i32_1 = arith.constant 0 : i32
    return %arg0, %c0_i32, %c0_i32_0 : i32, i32, i32
  }
  func.func @transform_2(%arg0: i32) -> (i32, i32) {
    %c0_i32 = arith.constant 0 : i32
    %c0_i32_0 = arith.constant 0 : i32
    %c0_i32_1 = arith.constant 0 : i32
    return %c0_i32, %c0_i32_0 : i32, i32
  }
  func.func @transform_3(%arg0: i32) -> (i32, i32) {
    %c0_i32 = arith.constant 0 : i32
    %c0_i32_0 = arith.constant 0 : i32
    %c0_i32_1 = arith.constant 0 : i32
    return %c0_i32, %c0_i32_0 : i32, i32
  }
  func.func @transform_4(%arg0: i32) -> (i32, i32) {
    %c0_i32 = arith.constant 0 : i32
    %c0_i32_0 = arith.constant 0 : i32
    %c0_i32_1 = arith.constant 0 : i32
    return %c0_i32, %c0_i32_0 : i32, i32
  }
  func.func @transform_5(%arg0: i32) -> (i32, i32) {
    %c0_i32 = arith.constant 0 : i32
    %c0_i32_0 = arith.constant 0 : i32
    %c0_i32_1 = arith.constant 0 : i32
    return %c0_i32, %c0_i32_0 : i32, i32
  }
  func.func @transform_6(%arg0: i32) -> (i32, i32) {
    %c0_i32 = arith.constant 0 : i32
    %c0_i32_0 = arith.constant 0 : i32
    %c0_i32_1 = arith.constant 0 : i32
    return %c0_i32, %c0_i32_0 : i32, i32
  }
  func.func @transform_7(%arg0: i32) -> (i32, i32, i32) {
    %c0_i32 = arith.constant 0 : i32
    %c0_i32_0 = arith.constant 0 : i32
    %c0_i32_1 = arith.constant 0 : i32
    return %arg0, %c0_i32, %c0_i32_0 : i32, i32, i32
  }
}

</mosaic_0001>

<llo_original>
// kernel: tpu_custom_call.1
$region0: #{tpu_custom_call.1}
  #allocation0 [shape = 'u32[]', space=smem, size = 0x4, offset = 0x4, fixed_abs, tag = 'smem constant byte address 0x4 - core index']
  #allocation1 [shape = 'u32[144,128]{1,0:T(1,128)}', space=vmem, size = 0x12000, scoped, tag = 'internal scratch']
  %s0 = inlined_call_operand.hbm [shape: f32[8,8,32], index: 0, kind: input, shape index: {}]
  %s1 = inlined_call_operand.hbm [shape: f32[8,16,32], index: 1, kind: input, shape index: {}]
  %s2 = inlined_call_operand.hbm [shape: f32[32,32], index: 2, kind: input, shape index: {}]
  %s3 = inlined_call_operand.hbm [shape: f32[30,32], index: 3, kind: input, shape index: {}]
  %s4 = inlined_call_operand.hbm [shape: f32[30,32], index: 4, kind: input, shape index: {}]
  %s5 = inlined_call_operand.vmem [shape: f32[1,30], index: 5, kind: input, shape index: {}]
  %s6 = inlined_call_operand.vmem [shape: f32[1,30], index: 6, kind: input, shape index: {}]
  %s7 = inlined_call_operand.hbm [shape: f32[8,2,32], index: 7, kind: output, shape index: {}]
  %s8 = sld [smem:[#allocation0]]
  $region81: #{tpu_custom_call.1} parent=0
    _
  %s10 = ssub.s32 1, %s8
  %s11 = scalar_select 0, %s10, %s8
  $region1: #{tpu_custom_call.1} parent=0
    #allocation2 [shape = 'u8[32768]{0}', space=vmem, size = 0x8000, scoped, tag = 'input window, operand 0']
    #allocation3 [shape = 's32[2]{0}', space=sflag, size = 0x8, scoped, tag = 'scoped memory for tpu_custom_call.1']
    #allocation4 [shape = 's32[2]{0}', space=sflag, size = 0x8, scoped, tag = 'scoped memory for tpu_custom_call.1']
    #allocation5 [shape = 'u8[65536]{0}', space=vmem, size = 0x10000, scoped, tag = 'input window, operand 1']
    #allocation6 [shape = 's32[2]{0}', space=sflag, size = 0x8, scoped, tag = 'scoped memory for tpu_custom_call.1']
    #allocation7 [shape = 'u8[16384]{0}', space=vmem, size = 0x4000, scoped, tag = 'input window, operand 2, single buffered']
    #allocation8 [shape = 'u8[16384]{0}', space=vmem, size = 0x4000, scoped, tag = 'input window, operand 3, single buffered']
    #allocation9 [shape = 's32[1]{0}', space=sflag, size = 0x4, scoped, tag = 'scoped memory for tpu_custom_call.1']
    #allocation10 [shape = 'u8[16384]{0}', space=vmem, size = 0x4000, scoped, tag = 'input window, operand 4, single buffered']
    #allocation11 [shape = 'u8[8192]{0}', space=vmem, size = 0x2000, scoped, tag = 'output window, operand 0']
    %12 = vsyncpa [#allocation3], 0
    %s13 = scalar_lea.sflag [#allocation3], 1
    %14 = vsyncpa %s13, 0
    %15 = vsyncpa [#allocation6], 0
    %s16 = scalar_lea.sflag [#allocation6], 1
    %17 = vsyncpa %s16, 0
    %18 = vsyncpa [#allocation9], 0
    %19 = vsyncpa [#allocation4], 0
    %s20 = scalar_lea.sflag [#allocation4], 1
    %21 = vsyncpa %s20, 0
    loop: start=0, step=1, limit=4
    $region2: #{tpu_custom_call.1} parent=1 // loop_pre_header
      _
    $region3: #{tpu_custom_call.1} parent=1 // loop_header
      %s23 = sphi 0, %s27
      %p24 = scmp.ge.s32.totalorder %s23, 4
      %s33 = sphi 0, %s35
      %s36 = sphi 0, %s33
      %s37 = sphi 0, %s36
      %s53 = sphi 0, %s37
      %s59 = sphi 0, %s61
      %s62 = sphi 0, %s59
      %s63 = sphi 0, %s62
      %s79 = sphi 0, %s63
      %s83 = sphi 0, %s83
      %s85 = sphi 0, %s83
      %s86 = sphi 0, %s85
      %s100 = sphi 0, %s86
      %s104 = sphi 0, %s104
      %s106 = sphi 0, %s104
      %s107 = sphi 0, %s106
      %s121 = sphi 0, %s107
      %s125 = sphi 0, %s125
      %s127 = sphi 0, %s125
      %s128 = sphi 0, %s127
      %s142 = sphi 0, %s128
      %s146 = sphi 0, %s146
      %s148 = sphi 0, %s146
      %s149 = sphi 0, %s148
      %s163 = sphi 0, %s149
      %s167 = sphi 0, %s167
      %s169 = sphi 0, %s167
      %s170 = sphi 0, %s169
      %s184 = sphi 0, %s170
      %s190 = sphi 0, %s192
      %s193 = sphi 0, %s190
      %s194 = sphi 0, %s193
      %s210 = sphi 0, %s194
    $region4: #{tpu_custom_call.1} parent=1 // loop_header_branch
      %26 = sbr.rel (%p24) target = $region8
    $region5: #{tpu_custom_call.1} parent=1 // loop_body
      %s28 = ssub.s32 %s23, 1
      %s29 = ssub.s32 %s23, 2
      %s30 = sadd.s32 %s23, 1
      %s31 = ssub.s32 %s23, %s30
      %p32 = scmp.eq.s32.totalorder %s31, 0
      %s34 = sadd.s32 %s33, 1
      %s35 = scalar_select %p32, %s33, %s34
      %p38 = pneg %p32
      %p39 = scmp.eq.s32.totalorder %s23, 1
      %p40 = por %p38, %p39
      %p41 = scmp.ne.s32.totalorder %s33, %s36
      %p42 = scmp.eq.s32.totalorder %s23, 0
      %p43 = por %p41, %p42
      %p44 = scmp.ne.s32.totalorder %s33, %s36
      %p45 = scmp.eq.s32.totalorder %s28, 1
      %p46 = por %p44, %p45
      %p47 = scmp.ne.s32.totalorder %s36, %s37
      %p48 = scmp.eq.s32.totalorder %s28, 0
      %p49 = por %p47, %p48
      %p50 = scmp.ne.s32.totalorder %s36, %s37
      %p51 = scmp.eq.s32.totalorder %s29, 1
      %p52 = por %p50, %p51
      %p54 = scmp.ne.s32.totalorder %s37, %s53
      %p55 = scmp.eq.s32.totalorder %s29, 0
      %p56 = por %p54, %p55
      %s57 = ssub.s32 %s23, %s30
      %p58 = scmp.eq.s32.totalorder %s57, 0
      %s60 = sadd.s32 %s59, 1
      %s61 = scalar_select %p58, %s59, %s60
      %p64 = pneg %p58
      %p65 = scmp.eq.s32.totalorder %s23, 1
      %p66 = por %p64, %p65
      %p67 = scmp.ne.s32.totalorder %s59, %s62
      %p68 = scmp.eq.s32.totalorder %s23, 0
      %p69 = por %p67, %p68
      %p70 = scmp.ne.s32.totalorder %s59, %s62
      %p71 = scmp.eq.s32.totalorder %s28, 1
      %p72 = por %p70, %p71
      %p73 = scmp.ne.s32.totalorder %s62, %s63
      %p74 = scmp.eq.s32.totalorder %s28, 0
      %p75 = por %p73, %p74
      %p76 = scmp.ne.s32.totalorder %s62, %s63
      %p77 = scmp.eq.s32.totalorder %s29, 1
      %p78 = por %p76, %p77
      %p80 = scmp.ne.s32.totalorder %s63, %s79
      %p81 = scmp.eq.s32.totalorder %s29, 0
      %p82 = por %p80, %p81
      %s84 = sadd.s32 %s83, 1
      %p87 = scmp.eq.s32.totalorder %s23, 1
      %p88 = scmp.ne.s32.totalorder %s83, %s85
      %p89 = scmp.eq.s32.totalorder %s23, 0
      %p90 = por %p88, %p89
      %p91 = scmp.ne.s32.totalorder %s83, %s85
      %p92 = scmp.eq.s32.totalorder %s28, 1
      %p93 = por %p91, %p92
      %p94 = scmp.ne.s32.totalorder %s85, %s86
      %p95 = scmp.eq.s32.totalorder %s28, 0
      %p96 = por %p94, %p95
      %p97 = scmp.ne.s32.totalorder %s85, %s86
      %p98 = scmp.eq.s32.totalorder %s29, 1
      %p99 = por %p97, %p98
      %p101 = scmp.ne.s32.totalorder %s86, %s100
      %p102 = scmp.eq.s32.totalorder %s29, 0
      %p103 = por %p101, %p102
      %s105 = sadd.s32 %s104, 1
      %p108 = scmp.eq.s32.totalorder %s23, 1
      %p109 = scmp.ne.s32.totalorder %s104, %s106
      %p110 = scmp.eq.s32.totalorder %s23, 0
      %p111 = por %p109, %p110
      %p112 = scmp.ne.s32.totalorder %s104, %s106
      %p113 = scmp.eq.s32.totalorder %s28, 1
      %p114 = por %p112, %p113
      %p115 = scmp.ne.s32.totalorder %s106, %s107
      %p116 = scmp.eq.s32.totalorder %s28, 0
      %p117 = por %p115, %p116
      %p118 = scmp.ne.s32.totalorder %s106, %s107
      %p119 = scmp.eq.s32.totalorder %s29, 1
      %p120 = por %p118, %p119
      %p122 = scmp.ne.s32.totalorder %s107, %s121
      %p123 = scmp.eq.s32.totalorder %s29, 0
      %p124 = por %p122, %p123
      %s126 = sadd.s32 %s125, 1
      %p129 = scmp.eq.s32.totalorder %s23, 1
      %p130 = scmp.ne.s32.totalorder %s125, %s127
      %p131 = scmp.eq.s32.totalorder %s23, 0
      %p132 = por %p130, %p131
      %p133 = scmp.ne.s32.totalorder %s125, %s127
      %p134 = scmp.eq.s32.totalorder %s28, 1
      %p135 = por %p133, %p134
      %p136 = scmp.ne.s32.totalorder %s127, %s128
      %p137 = scmp.eq.s32.totalorder %s28, 0
      %p138 = por %p136, %p137
      %p139 = scmp.ne.s32.totalorder %s127, %s128
      %p140 = scmp.eq.s32.totalorder %s29, 1
      %p141 = por %p139, %p140
      %p143 = scmp.ne.s32.totalorder %s128, %s142
      %p144 = scmp.eq.s32.totalorder %s29, 0
      %p145 = por %p143, %p144
      %s147 = sadd.s32 %s146, 1
      %p150 = scmp.eq.s32.totalorder %s23, 1
      %p151 = scmp.ne.s32.totalorder %s146, %s148
      %p152 = scmp.eq.s32.totalorder %s23, 0
      %p153 = por %p151, %p152
      %p154 = scmp.ne.s32.totalorder %s146, %s148
      %p155 = scmp.eq.s32.totalorder %s28, 1
      %p156 = por %p154, %p155
      %p157 = scmp.ne.s32.totalorder %s148, %s149
      %p158 = scmp.eq.s32.totalorder %s28, 0
      %p159 = por %p157, %p158
      %p160 = scmp.ne.s32.totalorder %s148, %s149
      %p161 = scmp.eq.s32.totalorder %s29, 1
      %p162 = por %p160, %p161
      %p164 = scmp.ne.s32.totalorder %s149, %s163
      %p165 = scmp.eq.s32.totalorder %s29, 0
      %p166 = por %p164, %p165
      %s168 = sadd.s32 %s167, 1
      %p171 = scmp.eq.s32.totalorder %s23, 1
      %p172 = scmp.ne.s32.totalorder %s167, %s169
      %p173 = scmp.eq.s32.totalorder %s23, 0
      %p174 = por %p172, %p173
      %p175 = scmp.ne.s32.totalorder %s167, %s169
      %p176 = scmp.eq.s32.totalorder %s28, 1
      %p177 = por %p175, %p176
      %p178 = scmp.ne.s32.totalorder %s169, %s170
      %p179 = scmp.eq.s32.totalorder %s28, 0
      %p180 = por %p178, %p179
      %p181 = scmp.ne.s32.totalorder %s169, %s170
      %p182 = scmp.eq.s32.totalorder %s29, 1
      %p183 = por %p181, %p182
      %p185 = scmp.ne.s32.totalorder %s170, %s184
      %p186 = scmp.eq.s32.totalorder %s29, 0
      %p187 = por %p185, %p186
      %s188 = ssub.s32 %s23, %s30
      %p189 = scmp.eq.s32.totalorder %s188, 0
      %s191 = sadd.s32 %s190, 1
      %s192 = scalar_select %p189, %s190, %s191
      %p195 = pneg %p189
      %p196 = scmp.eq.s32.totalorder %s23, 1
      %p197 = por %p195, %p196
      %p198 = scmp.ne.s32.totalorder %s190, %s193
      %p199 = scmp.eq.s32.totalorder %s23, 0
      %p200 = por %p198, %p199
      %p201 = scmp.ne.s32.totalorder %s190, %s193
      %p202 = scmp.eq.s32.totalorder %s28, 1
      %p203 = por %p201, %p202
      %p204 = scmp.ne.s32.totalorder %s193, %s194
      %p205 = scmp.eq.s32.totalorder %s28, 0
      %p206 = por %p204, %p205
      %p207 = scmp.ne.s32.totalorder %s193, %s194
      %p208 = scmp.eq.s32.totalorder %s29, 1
      %p209 = por %p207, %p208
      %p211 = scmp.ne.s32.totalorder %s194, %s210
      %p212 = scmp.eq.s32.totalorder %s29, 0
      %p213 = por %p211, %p212
      %p214 = scmp.le.s32.totalorder 1, %s23
      %p215 = scmp.lt.s32.totalorder %s23, 3
      %p216 = pnand %p214, %p215
      %p217 = pneg %p216
      // Predicated region
      $region9: #{tpu_custom_call.1} parent=5 // pred_check
        _
      $region10: #{tpu_custom_call.1} parent=5 // pred_check_branch
        %219 = sbr.rel (%p216) target = $region12
      $region11: #{tpu_custom_call.1} parent=5 // pred_region
        %s220 = ssub.s32 %s23, 1
        // Predicated region
        $region13: #{tpu_custom_call.1} parent=11 // pred_check
          %p221 = pneg %p96
        $region14: #{tpu_custom_call.1} parent=11 // pred_check_branch
          %223 = sbr.rel (%p221) target = $region16
        $region15: #{tpu_custom_call.1} parent=11 // pred_region
          %s225 = ssub.s32 512, 512
          %226 = vsyncadd [#allocation6], %s225
          %s227 = sshll.u32 [#allocation7], 4
          %s228 = int_to_ptr.vmem [resolvable:$true] %s227
          %233 = dma.hbm_to_vmem [thread:$0]  %s2, 512, %s228, [#allocation6], 128, 128, 8
        $region16: #{tpu_custom_call.1} parent=11 // pred_fallthru
          _
        // Predicated region
        $region17: #{tpu_custom_call.1} parent=11 // pred_check
          %p234 = pneg %p117
        $region18: #{tpu_custom_call.1} parent=11 // pred_check_branch
          %236 = sbr.rel (%p234) target = $region20
        $region19: #{tpu_custom_call.1} parent=11 // pred_region
          %s238 = ssub.s32 512, 512
          %239 = vsyncadd [#allocation9], %s238
          %s240 = sshll.u32 [#allocation8], 4
          %s241 = int_to_ptr.vmem [resolvable:$true] %s240
          %246 = dma.hbm_to_vmem [thread:$0]  %s3, 512, %s241, [#allocation9], 128, 128, 8
        $region20: #{tpu_custom_call.1} parent=11 // pred_fallthru
          _
        // Predicated region
        $region21: #{tpu_custom_call.1} parent=11 // pred_check
          %p247 = pneg %p138
        $region22: #{tpu_custom_call.1} parent=11 // pred_check_branch
          %249 = sbr.rel (%p247) target = $region24
        $region23: #{tpu_custom_call.1} parent=11 // pred_region
          %s251 = ssub.s32 512, 512
          %252 = vsyncadd [#allocation9], %s251
          %s253 = sshll.u32 [#allocation10], 4
          %s254 = int_to_ptr.vmem [resolvable:$true] %s253
          %259 = dma.hbm_to_vmem [thread:$0]  %s4, 512, %s254, [#allocation9], 128, 128, 8
        $region24: #{tpu_custom_call.1} parent=11 // pred_fallthru
          _
        // Predicated region
        $region25: #{tpu_custom_call.1} parent=11 // pred_check
          %p260 = pneg %p159
        $region26: #{tpu_custom_call.1} parent=11 // pred_check_branch
          %262 = sbr.rel (%p260) target = $region28
        $region27: #{tpu_custom_call.1} parent=11 // pred_region
          _
        $region28: #{tpu_custom_call.1} parent=11 // pred_fallthru
          _
        // Predicated region
        $region29: #{tpu_custom_call.1} parent=11 // pred_check
          %p263 = pneg %p180
        $region30: #{tpu_custom_call.1} parent=11 // pred_check_branch
          %265 = sbr.rel (%p263) target = $region32
        $region31: #{tpu_custom_call.1} parent=11 // pred_region
          _
        $region32: #{tpu_custom_call.1} parent=11 // pred_fallthru
          _
      $region12: #{tpu_custom_call.1} parent=5 // pred_fallthru
        _
      %p266 = scmp.lt.s32.totalorder %s23, 2
      // Predicated region
      $region33: #{tpu_custom_call.1} parent=5 // pred_check
        %p267 = pneg %p266
      $region34: #{tpu_custom_call.1} parent=5 // pred_check_branch
        %269 = sbr.rel (%p267) target = $region36
      $region35: #{tpu_custom_call.1} parent=5 // pred_region
        // Predicated region
        $region37: #{tpu_custom_call.1} parent=35 // pred_check
          %p270 = pneg %p43
        $region38: #{tpu_custom_call.1} parent=35 // pred_check_branch
          %272 = sbr.rel (%p270) target = $region40
        $region39: #{tpu_custom_call.1} parent=35 // pred_region
          %s273 = sand.u32 %s33, 1
          %s274 = scalar_lea.sflag [#allocation3], %s273
          %s275 = sand.u32 %s33, 1
          %s276 = smul.addr %s275, 32
          %s277 = scalar_lea.vmem [#allocation2], %s276
          %s278 = smul.u32 4, %s23
          %s280 = ssub.s32 512, 512
          %281 = vsyncadd %s274, %s280
          %s282 = smul.addr %s278, 128
          %s283 = scalar_lea.hbm %s0, %s282
          %s284 = sshll.u32 %s277, 4
          %s285 = int_to_ptr.vmem [resolvable:$true] %s284
          %290 = dma.hbm_to_vmem [thread:$0]  %s283, 512, %s285, %s274, 128, 128, 8
        $region40: #{tpu_custom_call.1} parent=35 // pred_fallthru
          _
        // Predicated region
        $region41: #{tpu_custom_call.1} parent=35 // pred_check
          %p291 = pneg %p69
        $region42: #{tpu_custom_call.1} parent=35 // pred_check_branch
          %293 = sbr.rel (%p291) target = $region44
        $region43: #{tpu_custom_call.1} parent=35 // pred_region
          %s294 = sand.u32 %s23, 1
          %s295 = scalar_lea.sflag [#allocation6], %s294
          %s296 = sand.u32 %s59, 1
          %s297 = smul.addr %s296, 64
          %s298 = scalar_lea.vmem [#allocation5], %s297
          %s299 = smul.u32 4, %s23
          %s301 = ssub.s32 1024, 1024
          %302 = vsyncadd %s295, %s301
          %s303 = smul.addr %s299, 2
          %s304 = smul.addr %s303, 128
          %s305 = scalar_lea.hbm %s1, %s304
          %s306 = sshll.u32 %s298, 4
          %s307 = int_to_ptr.vmem [resolvable:$true] %s306
          %312 = dma.hbm_to_vmem [thread:$0]  %s305, 1024, %s307, %s295, 128, 128, 8
        $region44: #{tpu_custom_call.1} parent=35 // pred_fallthru
          _
      $region36: #{tpu_custom_call.1} parent=5 // pred_fallthru
        _
      %p313 = scmp.le.s32.totalorder 1, %s23
      %p314 = scmp.lt.s32.totalorder %s23, 3
      %p315 = pnand %p313, %p314
      %p316 = pneg %p315
      // Predicated region
      $region45: #{tpu_custom_call.1} parent=5 // pred_check
        _
      $region46: #{tpu_custom_call.1} parent=5 // pred_check_branch
        %318 = sbr.rel (%p315) target = $region48
      $region47: #{tpu_custom_call.1} parent=5 // pred_region
        %s319 = ssub.s32 %s23, 1
        %s320 = sand.u32 %s36, 1
        %s321 = scalar_lea.sflag [#allocation3], %s320
        %s322 = sand.u32 %s36, 1
        %s323 = smul.addr %s322, 32
        %s324 = scalar_lea.vmem [#allocation2], %s323
        // Predicated region
        $region49: #{tpu_custom_call.1} parent=47 // pred_check
          %p325 = pneg %p49
        $region50: #{tpu_custom_call.1} parent=47 // pred_check_branch
          %327 = sbr.rel (%p325) target = $region52
        $region51: #{tpu_custom_call.1} parent=47 // pred_region
          %328 = dma.done %s321, 512
        $region52: #{tpu_custom_call.1} parent=47 // pred_fallthru
          _
        %s329 = sand.u32 %s28, 1
        %s330 = scalar_lea.sflag [#allocation6], %s329
        %s331 = sand.u32 %s62, 1
        %s332 = smul.addr %s331, 64
        %s333 = scalar_lea.vmem [#allocation5], %s332
        // Predicated region
        $region53: #{tpu_custom_call.1} parent=47 // pred_check
          %p334 = pneg %p75
        $region54: #{tpu_custom_call.1} parent=47 // pred_check_branch
          %336 = sbr.rel (%p334) target = $region56
        $region55: #{tpu_custom_call.1} parent=47 // pred_region
          %337 = dma.done %s330, 1024
        $region56: #{tpu_custom_call.1} parent=47 // pred_fallthru
          _
        // Predicated region
        $region57: #{tpu_custom_call.1} parent=47 // pred_check
          %p338 = pneg %p96
        $region58: #{tpu_custom_call.1} parent=47 // pred_check_branch
          %340 = sbr.rel (%p338) target = $region60
        $region59: #{tpu_custom_call.1} parent=47 // pred_region
          %341 = dma.done [#allocation6], 512
        $region60: #{tpu_custom_call.1} parent=47 // pred_fallthru
          _
        // Predicated region
        $region61: #{tpu_custom_call.1} parent=47 // pred_check
          %p342 = pneg %p117
        $region62: #{tpu_custom_call.1} parent=47 // pred_check_branch
          %344 = sbr.rel (%p342) target = $region64
        $region63: #{tpu_custom_call.1} parent=47 // pred_region
          %345 = dma.done [#allocation9], 512
        $region64: #{tpu_custom_call.1} parent=47 // pred_fallthru
          _
        // Predicated region
        $region65: #{tpu_custom_call.1} parent=47 // pred_check
          %p346 = pneg %p138
        $region66: #{tpu_custom_call.1} parent=47 // pred_check_branch
          %348 = sbr.rel (%p346) target = $region68
        $region67: #{tpu_custom_call.1} parent=47 // pred_region
          %349 = dma.done [#allocation9], 512
        $region68: #{tpu_custom_call.1} parent=47 // pred_fallthru
          _
        %s350 = sand.u32 %s36, 1
        %s351 = scalar_lea.sflag [#allocation3], %s350
        %s352 = sand.u32 %s36, 1
        %s353 = smul.addr %s352, 32
        %s354 = scalar_lea.vmem [#allocation2], %s353
        %p355 = pneg %p49
        %p356 = pneg %p46
        %s357 = sand.u32 %s28, 1
        %s358 = scalar_lea.sflag [#allocation6], %s357
        %s359 = sand.u32 %s62, 1
        %s360 = smul.addr %s359, 64
        %s361 = scalar_lea.vmem [#allocation5], %s360
        %p362 = pneg %p75
        %p363 = pneg %p72
        %p364 = pneg %p96
        %p365 = pneg %p93
        %p366 = pneg %p117
        %p367 = pneg %p114
        %p368 = pneg %p138
        %p369 = pneg %p135
        %p370 = pneg %p159
        %p371 = pneg %p156
        %p372 = pneg %p180
        %p373 = pneg %p177
        %p374 = pneg %p206
        %p375 = pneg %p203
        %s376 = sand.u32 %s193, 1
        %s377 = scalar_lea.sflag [#allocation4], %s376
        %s378 = sand.u32 %s193, 1
        %s379 = smul.addr %s378, 8
        %s380 = scalar_lea.vmem [#allocation11], %s379
        %s381 = smul.u32 4, %s28
        %s382 = smul.u32 4, %s28
        %s383 = smul.u32 4, %s28
        %v384 = vld [vmem:[%s324] sm:$0xff]
        %v385 = vld [vmem:[%s324 + $0x8] sm:$0xff]
        %v386 = vld [vmem:[%s324 + $0x10] sm:$0xff]
        %v387 = vld [vmem:[%s324 + $0x18] sm:$0xff]
        %v388 = vld [vmem:[%s333] sm:$0xff]
        %v389 = vld [vmem:[%s333 + $0x8] sm:$0xff]
        %v390 = vld [vmem:[%s333 + $0x10] sm:$0xff]
        %v391 = vld [vmem:[%s333 + $0x18] sm:$0xff]
        %v392 = vld [vmem:[%s333 + $0x20] sm:$0xff]
        %v393 = vld [vmem:[%s333 + $0x28] sm:$0xff]
        %v394 = vld [vmem:[%s333 + $0x30] sm:$0xff]
        %v395 = vld [vmem:[%s333 + $0x38] sm:$0xff]
        %v396 = vld [vmem:[#allocation7] sm:$0xff]
        %v397 = vld [vmem:[#allocation7 + $0x8] sm:$0xff]
        %v398 = vld [vmem:[#allocation7 + $0x10] sm:$0xff]
        %v399 = vld [vmem:[#allocation7 + $0x18] sm:$0xff]
        %v400 = vld [vmem:[#allocation8] sm:$0xff]
        %v401 = vld [vmem:[#allocation8 + $0x8] sm:$0xff]
        %v402 = vld [vmem:[#allocation8 + $0x10] sm:$0xff]
        %v403 = vld [vmem:[#allocation8 + $0x18] sm:$0x3f]
        %v404 = vld [vmem:[#allocation10] sm:$0xff]
        %v405 = vld [vmem:[#allocation10 + $0x8] sm:$0xff]
        %v406 = vld [vmem:[#allocation10 + $0x10] sm:$0xff]
        %v407 = vld [vmem:[#allocation10 + $0x18] sm:$0x3f]
        %v408 = vld [vmem:[%s5] sm:$0x1]
        %v409 = vld [vmem:[%s6] sm:$0x1]
        %vm410 = vcmask 261120
        %v412 = vsel %vm410, %v384, 0
        %v415 = vsel %vm410, %v385, 0
        %v418 = vsel %vm410, %v386, 0
        %v421 = vsel %vm410, %v387, 0
        %423 = vmatprep.subr.mxu0 0.0
        %424 = vmatpush1.msra.mxu0 %v396
        %425 = vmatprep.subr.mxu0 0.0
        %426 = vmatpush1.msra.mxu0 %v397
        %427 = vmatprep.subr.mxu0 0.0
        %428 = vmatpush1.msra.mxu0 %v398
        %429 = vmatprep.subr.mxu0 0.0
        %430 = vmatpush1.msra.mxu0 %v399
        %431 = vmatprep.subr.mxu0 0.0
        %432 = vmatpush1.msra.mxu0 0.0
        %433 = vmatprep.subr.mxu0 0.0
        %434 = vmatpush1.msra.mxu0 0.0
        %435 = vmatprep.subr.mxu0 0.0
        %436 = vmatpush1.msra.mxu0 0.0
        %437 = vmatprep.subr.mxu0 0.0
        %438 = vmatpush1.msra.mxu0 0.0
        %439 = vmatprep.subr.mxu0 0.0
        %440 = vmatpush1.msra.mxu0 0.0
        %441 = vmatprep.subr.mxu0 0.0
        %442 = vmatpush1.msra.mxu0 0.0
        %443 = vmatprep.subr.mxu0 0.0
        %444 = vmatpush1.msra.mxu0 0.0
        %445 = vmatprep.subr.mxu0 0.0
        %446 = vmatpush1.msra.mxu0 0.0
        %447 = vmatprep.subr.mxu0 0.0
        %448 = vmatpush1.msra.mxu0 0.0
        %449 = vmatprep.subr.mxu0 0.0
        %450 = vmatpush1.msra.mxu0 0.0
        %451 = vmatprep.subr.mxu0 0.0
        %452 = vmatpush1.msra.mxu0 0.0
        %453 = vmatprep.subr.mxu0 0.0
        %454 = vmatpush1.msra.mxu0 0.0
        %455 = vmatprep.subr.mxu0 0.0
        %456 = vmatpush1.msra.mxu0 0.0
        %457 = vmatprep.subr.mxu0 0.0
        %458 = vmatpush1.msra.mxu0 0.0
        %459 = vmatprep.subr.mxu0 0.0
        %460 = vmatpush1.msra.mxu0 0.0
        %461 = vmatprep.subr.mxu0 0.0
        %462 = vmatpush1.msra.mxu0 0.0
        %463 = vmatprep.subr.mxu0 0.0
        %464 = vmatpush1.msra.mxu0 0.0
        %465 = vmatprep.subr.mxu0 0.0
        %466 = vmatpush1.msra.mxu0 0.0
        %467 = vmatprep.subr.mxu0 0.0
        %468 = vmatpush1.msra.mxu0 0.0
        %469 = vmatprep.subr.mxu0 0.0
        %470 = vmatpush1.msra.mxu0 0.0
        %471 = vmatprep.subr.mxu0 0.0
        %472 = vmatpush1.msra.mxu0 0.0
        %473 = vmatprep.subr.mxu0 0.0
        %474 = vmatpush1.msra.mxu0 0.0
        %475 = vmatprep.subr.mxu0 0.0
        %476 = vmatpush1.msra.mxu0 0.0
        %477 = vmatprep.subr.mxu0 0.0
        %478 = vmatpush1.msra.mxu0 0.0
        %479 = vmatprep.subr.mxu0 0.0
        %480 = vmatpush1.msra.mxu0 0.0
        %481 = vmatprep.subr.mxu0 0.0
        %482 = vmatpush1.msra.mxu0 0.0
        %483 = vmatprep.subr.mxu0 0.0
        %484 = vmatpush1.msra.mxu0 0.0
        %485 = vmatprep.subr.mxu0 0.0
        %486 = vmatpush1.msra.mxu0 0.0
        %487 = vmatprep.mubr.f32.mxu0 0.0
        %488 = vmatmul.mubr.f32.gmra.mrb[0].mxu0 %v412
        %v489 = vpop.f32.mrb[0].mxu0
        %v490 = vadd.f32 0.0, %v489
        %v491 = vpop.f32.mrb[0].mxu0
        %492 = vmatprep.mubr.f32.mxu0 0.0
        %493 = vmatmul.mubr.f32.gmra.mrb[0].mxu0 %v415
        %v494 = vpop.f32.mrb[0].mxu0
        %v495 = vadd.f32 0.0, %v494
        %v496 = vpop.f32.mrb[0].mxu0
        %497 = vmatprep.mubr.f32.mxu0 0.0
        %498 = vmatmul.mubr.f32.gmra.mrb[0].mxu0 %v418
        %v499 = vpop.f32.mrb[0].mxu0
        %v500 = vadd.f32 0.0, %v499
        %v501 = vpop.f32.mrb[0].mxu0
        %502 = vmatprep.mubr.f32.mxu0 0.0
        %503 = vmatmul.mubr.f32.gmra.mrb[0].mxu0 %v421
        %v504 = vpop.f32.mrb[0].mxu0
        %v505 = vadd.f32 0.0, %v504
        %v506 = vpop.f32.mrb[0].mxu0
        %507 = vdwg.mxu0
        %v509 = vsel %vm410, %v404, 0
        %v512 = vsel %vm410, %v405, 0
        %v515 = vsel %vm410, %v406, 0
        %v518 = vsel %vm410, %v407, 0
        %520 = vmatprep.subr.mxu0 0.0
        %521 = vmatpush1.xpose.msra.mxu0 %v509
        %522 = vmatprep.subr.mxu0 0.0
        %523 = vmatpush1.xpose.msra.mxu0 %v512
        %524 = vmatprep.subr.mxu0 0.0
        %525 = vmatpush1.xpose.msra.mxu0 %v515
        %526 = vmatprep.subr.mxu0 0.0
        %527 = vmatpush1.xpose.msra.mxu0 %v518
        %528 = vmatprep.subr.mxu0 0.0
        %529 = vmatpush1.xpose.msra.mxu0 0.0
        %530 = vmatprep.subr.mxu0 0.0
        %531 = vmatpush1.xpose.msra.mxu0 0.0
        %532 = vmatprep.subr.mxu0 0.0
        %533 = vmatpush1.xpose.msra.mxu0 0.0
        %534 = vmatprep.subr.mxu0 0.0
        %535 = vmatpush1.xpose.msra.mxu0 0.0
        %536 = vmatprep.subr.mxu0 0.0
        %537 = vmatpush1.xpose.msra.mxu0 0.0
        %538 = vmatprep.subr.mxu0 0.0
        %539 = vmatpush1.xpose.msra.mxu0 0.0
        %540 = vmatprep.subr.mxu0 0.0
        %541 = vmatpush1.xpose.msra.mxu0 0.0
        %542 = vmatprep.subr.mxu0 0.0
        %543 = vmatpush1.xpose.msra.mxu0 0.0
        %544 = vmatprep.subr.mxu0 0.0
        %545 = vmatpush1.xpose.msra.mxu0 0.0
        %546 = vmatprep.subr.mxu0 0.0
        %547 = vmatpush1.xpose.msra.mxu0 0.0
        %548 = vmatprep.subr.mxu0 0.0
        %549 = vmatpush1.xpose.msra.mxu0 0.0
        %550 = vmatprep.subr.mxu0 0.0
        %551 = vmatpush1.xpose.msra.mxu0 0.0
        %552 = vmatprep.subr.mxu0 0.0
        %553 = vmatpush1.xpose.msra.mxu0 0.0
        %554 = vmatprep.subr.mxu0 0.0
        %555 = vmatpush1.xpose.msra.mxu0 0.0
        %556 = vmatprep.subr.mxu0 0.0
        %557 = vmatpush1.xpose.msra.mxu0 0.0
        %558 = vmatprep.subr.mxu0 0.0
        %559 = vmatpush1.xpose.msra.mxu0 0.0
        %560 = vmatprep.subr.mxu0 0.0
        %561 = vmatpush1.xpose.msra.mxu0 0.0
        %562 = vmatprep.subr.mxu0 0.0
        %563 = vmatpush1.xpose.msra.mxu0 0.0
        %564 = vmatprep.subr.mxu0 0.0
        %565 = vmatpush1.xpose.msra.mxu0 0.0
        %566 = vmatprep.subr.mxu0 0.0
        %567 = vmatpush1.xpose.msra.mxu0 0.0
        %568 = vmatprep.subr.mxu0 0.0
        %569 = vmatpush1.xpose.msra.mxu0 0.0
        %570 = vmatprep.subr.mxu0 0.0
        %571 = vmatpush1.xpose.msra.mxu0 0.0
        %572 = vmatprep.subr.mxu0 0.0
        %573 = vmatpush1.xpose.msra.mxu0 0.0
        %574 = vmatprep.subr.mxu0 0.0
        %575 = vmatpush1.xpose.msra.mxu0 0.0
        %576 = vmatprep.subr.mxu0 0.0
        %577 = vmatpush1.xpose.msra.mxu0 0.0
        %578 = vmatprep.subr.mxu0 0.0
        %579 = vmatpush1.xpose.msra.mxu0 0.0
        %580 = vmatprep.subr.mxu0 0.0
        %581 = vmatpush1.xpose.msra.mxu0 0.0
        %582 = vmatprep.subr.mxu0 0.0
        %583 = vmatpush1.xpose.msra.mxu0 0.0
        %584 = vmatprep.mubr.f32.mxu0 0.0
        %585 = vmatmul.mubr.f32.gmra.mrb[0].mxu0 %v412
        %v586 = vpop.f32.mrb[0].mxu0
        %v587 = vadd.f32 0.0, %v586
        %v588 = vpop.f32.mrb[0].mxu0
        %589 = vmatprep.mubr.f32.mxu0 0.0
        %590 = vmatmul.mubr.f32.gmra.mrb[0].mxu0 %v415
        %v591 = vpop.f32.mrb[0].mxu0
        %v592 = vadd.f32 0.0, %v591
        %v593 = vpop.f32.mrb[0].mxu0
        %594 = vmatprep.mubr.f32.mxu0 0.0
        %595 = vmatmul.mubr.f32.gmra.mrb[0].mxu0 %v418
        %v596 = vpop.f32.mrb[0].mxu0
        %v597 = vadd.f32 0.0, %v596
        %v598 = vpop.f32.mrb[0].mxu0
        %599 = vmatprep.mubr.f32.mxu0 0.0
        %600 = vmatmul.mubr.f32.gmra.mrb[0].mxu0 %v421
        %v601 = vpop.f32.mrb[0].mxu0
        %v602 = vadd.f32 0.0, %v601
        %v603 = vpop.f32.mrb[0].mxu0
        %604 = vdwg.mxu0
        %v606 = vsel %vm410, %v388, 0
        %v609 = vsel %vm410, %v389, 0
        %v612 = vsel %vm410, %v390, 0
        %v615 = vsel %vm410, %v391, 0
        %v618 = vsel %vm410, %v392, 0
        %v621 = vsel %vm410, %v393, 0
        %v624 = vsel %vm410, %v394, 0
        %v627 = vsel %vm410, %v395, 0
        %v630 = vsel %vm410, %v400, 0
        %v633 = vsel %vm410, %v401, 0
        %v636 = vsel %vm410, %v402, 0
        %v639 = vsel %vm410, %v403, 0
        %641 = vmatprep.subr.mxu0 0.0
        %642 = vmatpush1.xpose.msra.mxu0 %v630
        %643 = vmatprep.subr.mxu0 0.0
        %644 = vmatpush1.xpose.msra.mxu0 %v633
        %645 = vmatprep.subr.mxu0 0.0
        %646 = vmatpush1.xpose.msra.mxu0 %v636
        %647 = vmatprep.subr.mxu0 0.0
        %648 = vmatpush1.xpose.msra.mxu0 %v639
        %649 = vmatprep.subr.mxu0 0.0
        %650 = vmatpush1.xpose.msra.mxu0 0.0
        %651 = vmatprep.subr.mxu0 0.0
        %652 = vmatpush1.xpose.msra.mxu0 0.0
        %653 = vmatprep.subr.mxu0 0.0
        %654 = vmatpush1.xpose.msra.mxu0 0.0
        %655 = vmatprep.subr.mxu0 0.0
        %656 = vmatpush1.xpose.msra.mxu0 0.0
        %657 = vmatprep.subr.mxu0 0.0
        %658 = vmatpush1.xpose.msra.mxu0 0.0
        %659 = vmatprep.subr.mxu0 0.0
        %660 = vmatpush1.xpose.msra.mxu0 0.0
        %661 = vmatprep.subr.mxu0 0.0
        %662 = vmatpush1.xpose.msra.mxu0 0.0
        %663 = vmatprep.subr.mxu0 0.0
        %664 = vmatpush1.xpose.msra.mxu0 0.0
        %665 = vmatprep.subr.mxu0 0.0
        %666 = vmatpush1.xpose.msra.mxu0 0.0
        %667 = vmatprep.subr.mxu0 0.0
        %668 = vmatpush1.xpose.msra.mxu0 0.0
        %669 = vmatprep.subr.mxu0 0.0
        %670 = vmatpush1.xpose.msra.mxu0 0.0
        %671 = vmatprep.subr.mxu0 0.0
        %672 = vmatpush1.xpose.msra.mxu0 0.0
        %673 = vmatprep.subr.mxu0 0.0
        %674 = vmatpush1.xpose.msra.mxu0 0.0
        %675 = vmatprep.subr.mxu0 0.0
        %676 = vmatpush1.xpose.msra.mxu0 0.0
        %677 = vmatprep.subr.mxu0 0.0
        %678 = vmatpush1.xpose.msra.mxu0 0.0
        %679 = vmatprep.subr.mxu0 0.0
        %680 = vmatpush1.xpose.msra.mxu0 0.0
        %681 = vmatprep.subr.mxu0 0.0
        %682 = vmatpush1.xpose.msra.mxu0 0.0
        %683 = vmatprep.subr.mxu0 0.0
        %684 = vmatpush1.xpose.msra.mxu0 0.0
        %685 = vmatprep.subr.mxu0 0.0
        %686 = vmatpush1.xpose.msra.mxu0 0.0
        %687 = vmatprep.subr.mxu0 0.0
        %688 = vmatpush1.xpose.msra.mxu0 0.0
        %689 = vmatprep.subr.mxu0 0.0
        %690 = vmatpush1.xpose.msra.mxu0 0.0
        %691 = vmatprep.subr.mxu0 0.0
        %692 = vmatpush1.xpose.msra.mxu0 0.0
        %693 = vmatprep.subr.mxu0 0.0
        %694 = vmatpush1.xpose.msra.mxu0 0.0
        %695 = vmatprep.subr.mxu0 0.0
        %696 = vmatpush1.xpose.msra.mxu0 0.0
        %697 = vmatprep.subr.mxu0 0.0
        %698 = vmatpush1.xpose.msra.mxu0 0.0
        %699 = vmatprep.subr.mxu0 0.0
        %700 = vmatpush1.xpose.msra.mxu0 0.0
        %701 = vmatprep.subr.mxu0 0.0
        %702 = vmatpush1.xpose.msra.mxu0 0.0
        %703 = vmatprep.subr.mxu0 0.0
        %704 = vmatpush1.xpose.msra.mxu0 0.0
        %705 = vmatprep.mubr.f32.mxu0 0.0
        %706 = vmatmul.mubr.f32.gmra.mrb[0].mxu0 %v606
        %v707 = vpop.f32.mrb[0].mxu0
        %v708 = vadd.f32 0.0, %v707
        %v709 = vpop.f32.mrb[0].mxu0
        %710 = vmatprep.mubr.f32.mxu0 0.0
        %711 = vmatmul.mubr.f32.gmra.mrb[0].mxu0 %v609
        %v712 = vpop.f32.mrb[0].mxu0
        %v713 = vadd.f32 0.0, %v712
        %v714 = vpop.f32.mrb[0].mxu0
        %715 = vmatprep.mubr.f32.mxu0 0.0
        %716 = vmatmul.mubr.f32.gmra.mrb[0].mxu0 %v612
        %v717 = vpop.f32.mrb[0].mxu0
        %v718 = vadd.f32 0.0, %v717
        %v719 = vpop.f32.mrb[0].mxu0
        %720 = vmatprep.mubr.f32.mxu0 0.0
        %721 = vmatmul.mubr.f32.gmra.mrb[0].mxu0 %v615
        %v722 = vpop.f32.mrb[0].mxu0
        %v723 = vadd.f32 0.0, %v722
        %v724 = vpop.f32.mrb[0].mxu0
        %725 = vmatprep.mubr.f32.mxu0 0.0
        %726 = vmatmul.mubr.f32.gmra.mrb[0].mxu0 %v618
        %v727 = vpop.f32.mrb[0].mxu0
        %v728 = vadd.f32 0.0, %v727
        %v729 = vpop.f32.mrb[0].mxu0
        %730 = vmatprep.mubr.f32.mxu0 0.0
        %731 = vmatmul.mubr.f32.gmra.mrb[0].mxu0 %v621
        %v732 = vpop.f32.mrb[0].mxu0
        %v733 = vadd.f32 0.0, %v732
        %v734 = vpop.f32.mrb[0].mxu0
        %735 = vmatprep.mubr.f32.mxu0 0.0
        %736 = vmatmul.mubr.f32.gmra.mrb[0].mxu0 %v624
        %v737 = vpop.f32.mrb[0].mxu0
        %v738 = vadd.f32 0.0, %v737
        %v739 = vpop.f32.mrb[0].mxu0
        %740 = vmatprep.mubr.f32.mxu0 0.0
        %741 = vmatmul.mubr.f32.gmra.mrb[0].mxu0 %v627
        %v742 = vpop.f32.mrb[0].mxu0
        %v743 = vadd.f32 0.0, %v742
        %v744 = vpop.f32.mrb[0].mxu0
        %745 = vdwg.mxu0
        %v747 = vsel %vm410, %v490, 0
        %749 = vmatprep.subr.mxu0 0.0
        %750 = vmatpush1.xpose.msra.mxu0 %v606
        %751 = vmatprep.subr.mxu0 0.0
        %752 = vmatpush1.xpose.msra.mxu0 %v609
        %753 = vmatprep.subr.mxu0 0.0
        %754 = vmatpush1.xpose.msra.mxu0 0.0
        %755 = vmatprep.subr.mxu0 0.0
        %756 = vmatpush1.xpose.msra.mxu0 0.0
        %757 = vmatprep.subr.mxu0 0.0
        %758 = vmatpush1.xpose.msra.mxu0 0.0
        %759 = vmatprep.subr.mxu0 0.0
        %760 = vmatpush1.xpose.msra.mxu0 0.0
        %761 = vmatprep.subr.mxu0 0.0
        %762 = vmatpush1.xpose.msra.mxu0 0.0
        %763 = vmatprep.subr.mxu0 0.0
        %764 = vmatpush1.xpose.msra.mxu0 0.0
        %765 = vmatprep.subr.mxu0 0.0
        %766 = vmatpush1.xpose.msra.mxu0 0.0
        %767 = vmatprep.subr.mxu0 0.0
        %768 = vmatpush1.xpose.msra.mxu0 0.0
        %769 = vmatprep.subr.mxu0 0.0
        %770 = vmatpush1.xpose.msra.mxu0 0.0
        %771 = vmatprep.subr.mxu0 0.0
        %772 = vmatpush1.xpose.msra.mxu0 0.0
        %773 = vmatprep.subr.mxu0 0.0
        %774 = vmatpush1.xpose.msra.mxu0 0.0
        %775 = vmatprep.subr.mxu0 0.0
        %776 = vmatpush1.xpose.msra.mxu0 0.0
        %777 = vmatprep.subr.mxu0 0.0
        %778 = vmatpush1.xpose.msra.mxu0 0.0
        %779 = vmatprep.subr.mxu0 0.0
        %780 = vmatpush1.xpose.msra.mxu0 0.0
        %781 = vmatprep.subr.mxu0 0.0
        %782 = vmatpush1.xpose.msra.mxu0 0.0
        %783 = vmatprep.subr.mxu0 0.0
        %784 = vmatpush1.xpose.msra.mxu0 0.0
        %785 = vmatprep.subr.mxu0 0.0
        %786 = vmatpush1.xpose.msra.mxu0 0.0
        %787 = vmatprep.subr.mxu0 0.0
        %788 = vmatpush1.xpose.msra.mxu0 0.0
        %789 = vmatprep.subr.mxu0 0.0
        %790 = vmatpush1.xpose.msra.mxu0 0.0
        %791 = vmatprep.subr.mxu0 0.0
        %792 = vmatpush1.xpose.msra.mxu0 0.0
        %793 = vmatprep.subr.mxu0 0.0
        %794 = vmatpush1.xpose.msra.mxu0 0.0
        %795 = vmatprep.subr.mxu0 0.0
        %796 = vmatpush1.xpose.msra.mxu0 0.0
        %797 = vmatprep.subr.mxu0 0.0
        %798 = vmatpush1.xpose.msra.mxu0 0.0
        %799 = vmatprep.subr.mxu0 0.0
        %800 = vmatpush1.xpose.msra.mxu0 0.0
        %801 = vmatprep.subr.mxu0 0.0
        %802 = vmatpush1.xpose.msra.mxu0 0.0
        %803 = vmatprep.subr.mxu0 0.0
        %804 = vmatpush1.xpose.msra.mxu0 0.0
        %805 = vmatprep.subr.mxu0 0.0
        %806 = vmatpush1.xpose.msra.mxu0 0.0
        %807 = vmatprep.subr.mxu0 0.0
        %808 = vmatpush1.xpose.msra.mxu0 0.0
        %809 = vmatprep.subr.mxu0 0.0
        %810 = vmatpush1.xpose.msra.mxu0 0.0
        %811 = vmatprep.subr.mxu0 0.0
        %812 = vmatpush1.xpose.msra.mxu0 0.0
        %813 = vmatprep.mubr.f32.mxu0 0.0
        %814 = vmatmul.mubr.f32.gmra.mrb[0].mxu0 %v747
        %v815 = vpop.f32.mrb[0].mxu0
        %v816 = vadd.f32 0.0, %v815
        %v817 = vpop.f32.mrb[0].mxu0
        %818 = vdwg.mxu0
        %v820 = vsel %vm410, %v495, 0
        %822 = vmatprep.subr.mxu0 0.0
        %823 = vmatpush1.xpose.msra.mxu0 %v612
        %824 = vmatprep.subr.mxu0 0.0
        %825 = vmatpush1.xpose.msra.mxu0 %v615
        %826 = vmatprep.subr.mxu0 0.0
        %827 = vmatpush1.xpose.msra.mxu0 0.0
        %828 = vmatprep.subr.mxu0 0.0
        %829 = vmatpush1.xpose.msra.mxu0 0.0
        %830 = vmatprep.subr.mxu0 0.0
        %831 = vmatpush1.xpose.msra.mxu0 0.0
        %832 = vmatprep.subr.mxu0 0.0
        %833 = vmatpush1.xpose.msra.mxu0 0.0
        %834 = vmatprep.subr.mxu0 0.0
        %835 = vmatpush1.xpose.msra.mxu0 0.0
        %836 = vmatprep.subr.mxu0 0.0
        %837 = vmatpush1.xpose.msra.mxu0 0.0
        %838 = vmatprep.subr.mxu0 0.0
        %839 = vmatpush1.xpose.msra.mxu0 0.0
        %840 = vmatprep.subr.mxu0 0.0
        %841 = vmatpush1.xpose.msra.mxu0 0.0
        %842 = vmatprep.subr.mxu0 0.0
        %843 = vmatpush1.xpose.msra.mxu0 0.0
        %844 = vmatprep.subr.mxu0 0.0
        %845 = vmatpush1.xpose.msra.mxu0 0.0
        %846 = vmatprep.subr.mxu0 0.0
        %847 = vmatpush1.xpose.msra.mxu0 0.0
        %848 = vmatprep.subr.mxu0 0.0
        %849 = vmatpush1.xpose.msra.mxu0 0.0
        %850 = vmatprep.subr.mxu0 0.0
        %851 = vmatpush1.xpose.msra.mxu0 0.0
        %852 = vmatprep.subr.mxu0 0.0
        %853 = vmatpush1.xpose.msra.mxu0 0.0
        %854 = vmatprep.subr.mxu0 0.0
        %855 = vmatpush1.xpose.msra.mxu0 0.0
        %856 = vmatprep.subr.mxu0 0.0
        %857 = vmatpush1.xpose.msra.mxu0 0.0
        %858 = vmatprep.subr.mxu0 0.0
        %859 = vmatpush1.xpose.msra.mxu0 0.0
        %860 = vmatprep.subr.mxu0 0.0
        %861 = vmatpush1.xpose.msra.mxu0 0.0
        %862 = vmatprep.subr.mxu0 0.0
        %863 = vmatpush1.xpose.msra.mxu0 0.0
        %864 = vmatprep.subr.mxu0 0.0
        %865 = vmatpush1.xpose.msra.mxu0 0.0
        %866 = vmatprep.subr.mxu0 0.0
        %867 = vmatpush1.xpose.msra.mxu0 0.0
        %868 = vmatprep.subr.mxu0 0.0
        %869 = vmatpush1.xpose.msra.mxu0 0.0
        %870 = vmatprep.subr.mxu0 0.0
        %871 = vmatpush1.xpose.msra.mxu0 0.0
        %872 = vmatprep.subr.mxu0 0.0
        %873 = vmatpush1.xpose.msra.mxu0 0.0
        %874 = vmatprep.subr.mxu0 0.0
        %875 = vmatpush1.xpose.msra.mxu0 0.0
        %876 = vmatprep.subr.mxu0 0.0
        %877 = vmatpush1.xpose.msra.mxu0 0.0
        %878 = vmatprep.subr.mxu0 0.0
        %879 = vmatpush1.xpose.msra.mxu0 0.0
        %880 = vmatprep.subr.mxu0 0.0
        %881 = vmatpush1.xpose.msra.mxu0 0.0
        %882 = vmatprep.subr.mxu0 0.0
        %883 = vmatpush1.xpose.msra.mxu0 0.0
        %884 = vmatprep.subr.mxu0 0.0
        %885 = vmatpush1.xpose.msra.mxu0 0.0
        %886 = vmatprep.mubr.f32.mxu0 0.0
        %887 = vmatmul.mubr.f32.gmra.mrb[0].mxu0 %v820
        %v888 = vpop.f32.mrb[0].mxu0
        %v889 = vadd.f32 0.0, %v888
        %v890 = vpop.f32.mrb[0].mxu0
        %891 = vdwg.mxu0
        %v893 = vsel %vm410, %v500, 0
        %895 = vmatprep.subr.mxu0 0.0
        %896 = vmatpush1.xpose.msra.mxu0 %v618
        %897 = vmatprep.subr.mxu0 0.0
        %898 = vmatpush1.xpose.msra.mxu0 %v621
        %899 = vmatprep.subr.mxu0 0.0
        %900 = vmatpush1.xpose.msra.mxu0 0.0
        %901 = vmatprep.subr.mxu0 0.0
        %902 = vmatpush1.xpose.msra.mxu0 0.0
        %903 = vmatprep.subr.mxu0 0.0
        %904 = vmatpush1.xpose.msra.mxu0 0.0
        %905 = vmatprep.subr.mxu0 0.0
        %906 = vmatpush1.xpose.msra.mxu0 0.0
        %907 = vmatprep.subr.mxu0 0.0
        %908 = vmatpush1.xpose.msra.mxu0 0.0
        %909 = vmatprep.subr.mxu0 0.0
        %910 = vmatpush1.xpose.msra.mxu0 0.0
        %911 = vmatprep.subr.mxu0 0.0
        %912 = vmatpush1.xpose.msra.mxu0 0.0
        %913 = vmatprep.subr.mxu0 0.0
        %914 = vmatpush1.xpose.msra.mxu0 0.0
        %915 = vmatprep.subr.mxu0 0.0
        %916 = vmatpush1.xpose.msra.mxu0 0.0
        %917 = vmatprep.subr.mxu0 0.0
        %918 = vmatpush1.xpose.msra.mxu0 0.0
        %919 = vmatprep.subr.mxu0 0.0
        %920 = vmatpush1.xpose.msra.mxu0 0.0
        %921 = vmatprep.subr.mxu0 0.0
        %922 = vmatpush1.xpose.msra.mxu0 0.0
        %923 = vmatprep.subr.mxu0 0.0
        %924 = vmatpush1.xpose.msra.mxu0 0.0
        %925 = vmatprep.subr.mxu0 0.0
        %926 = vmatpush1.xpose.msra.mxu0 0.0
        %927 = vmatprep.subr.mxu0 0.0
        %928 = vmatpush1.xpose.msra.mxu0 0.0
        %929 = vmatprep.subr.mxu0 0.0
        %930 = vmatpush1.xpose.msra.mxu0 0.0
        %931 = vmatprep.subr.mxu0 0.0
        %932 = vmatpush1.xpose.msra.mxu0 0.0
        %933 = vmatprep.subr.mxu0 0.0
        %934 = vmatpush1.xpose.msra.mxu0 0.0
        %935 = vmatprep.subr.mxu0 0.0
        %936 = vmatpush1.xpose.msra.mxu0 0.0
        %937 = vmatprep.subr.mxu0 0.0
        %938 = vmatpush1.xpose.msra.mxu0 0.0
        %939 = vmatprep.subr.mxu0 0.0
        %940 = vmatpush1.xpose.msra.mxu0 0.0
        %941 = vmatprep.subr.mxu0 0.0
        %942 = vmatpush1.xpose.msra.mxu0 0.0
        %943 = vmatprep.subr.mxu0 0.0
        %944 = vmatpush1.xpose.msra.mxu0 0.0
        %945 = vmatprep.subr.mxu0 0.0
        %946 = vmatpush1.xpose.msra.mxu0 0.0
        %947 = vmatprep.subr.mxu0 0.0
        %948 = vmatpush1.xpose.msra.mxu0 0.0
        %949 = vmatprep.subr.mxu0 0.0
        %950 = vmatpush1.xpose.msra.mxu0 0.0
        %951 = vmatprep.subr.mxu0 0.0
        %952 = vmatpush1.xpose.msra.mxu0 0.0
        %953 = vmatprep.subr.mxu0 0.0
        %954 = vmatpush1.xpose.msra.mxu0 0.0
        %955 = vmatprep.subr.mxu0 0.0
        %956 = vmatpush1.xpose.msra.mxu0 0.0
        %957 = vmatprep.subr.mxu0 0.0
        %958 = vmatpush1.xpose.msra.mxu0 0.0
        %959 = vmatprep.mubr.f32.mxu0 0.0
        %960 = vmatmul.mubr.f32.gmra.mrb[0].mxu0 %v893
        %v961 = vpop.f32.mrb[0].mxu0
        %v962 = vadd.f32 0.0, %v961
        %v963 = vpop.f32.mrb[0].mxu0
        %964 = vdwg.mxu0
        %v966 = vsel %vm410, %v505, 0
        %968 = vmatprep.subr.mxu0 0.0
        %969 = vmatpush1.xpose.msra.mxu0 %v624
        %970 = vmatprep.subr.mxu0 0.0
        %971 = vmatpush1.xpose.msra.mxu0 %v627
        %972 = vmatprep.subr.mxu0 0.0
        %973 = vmatpush1.xpose.msra.mxu0 0.0
        %974 = vmatprep.subr.mxu0 0.0
        %975 = vmatpush1.xpose.msra.mxu0 0.0
        %976 = vmatprep.subr.mxu0 0.0
        %977 = vmatpush1.xpose.msra.mxu0 0.0
        %978 = vmatprep.subr.mxu0 0.0
        %979 = vmatpush1.xpose.msra.mxu0 0.0
        %980 = vmatprep.subr.mxu0 0.0
        %981 = vmatpush1.xpose.msra.mxu0 0.0
        %982 = vmatprep.subr.mxu0 0.0
        %983 = vmatpush1.xpose.msra.mxu0 0.0
        %984 = vmatprep.subr.mxu0 0.0
        %985 = vmatpush1.xpose.msra.mxu0 0.0
        %986 = vmatprep.subr.mxu0 0.0
        %987 = vmatpush1.xpose.msra.mxu0 0.0
        %988 = vmatprep.subr.mxu0 0.0
        %989 = vmatpush1.xpose.msra.mxu0 0.0
        %990 = vmatprep.subr.mxu0 0.0
        %991 = vmatpush1.xpose.msra.mxu0 0.0
        %992 = vmatprep.subr.mxu0 0.0
        %993 = vmatpush1.xpose.msra.mxu0 0.0
        %994 = vmatprep.subr.mxu0 0.0
        %995 = vmatpush1.xpose.msra.mxu0 0.0
        %996 = vmatprep.subr.mxu0 0.0
        %997 = vmatpush1.xpose.msra.mxu0 0.0
        %998 = vmatprep.subr.mxu0 0.0
        %999 = vmatpush1.xpose.msra.mxu0 0.0
        %1000 = vmatprep.subr.mxu0 0.0
        %1001 = vmatpush1.xpose.msra.mxu0 0.0
        %1002 = vmatprep.subr.mxu0 0.0
        %1003 = vmatpush1.xpose.msra.mxu0 0.0
        %1004 = vmatprep.subr.mxu0 0.0
        %1005 = vmatpush1.xpose.msra.mxu0 0.0
        %1006 = vmatprep.subr.mxu0 0.0
        %1007 = vmatpush1.xpose.msra.mxu0 0.0
        %1008 = vmatprep.subr.mxu0 0.0
        %1009 = vmatpush1.xpose.msra.mxu0 0.0
        %1010 = vmatprep.subr.mxu0 0.0
        %1011 = vmatpush1.xpose.msra.mxu0 0.0
        %1012 = vmatprep.subr.mxu0 0.0
        %1013 = vmatpush1.xpose.msra.mxu0 0.0
        %1014 = vmatprep.subr.mxu0 0.0
        %1015 = vmatpush1.xpose.msra.mxu0 0.0
        %1016 = vmatprep.subr.mxu0 0.0
        %1017 = vmatpush1.xpose.msra.mxu0 0.0
        %1018 = vmatprep.subr.mxu0 0.0
        %1019 = vmatpush1.xpose.msra.mxu0 0.0
        %1020 = vmatprep.subr.mxu0 0.0
        %1021 = vmatpush1.xpose.msra.mxu0 0.0
        %1022 = vmatprep.subr.mxu0 0.0
        %1023 = vmatpush1.xpose.msra.mxu0 0.0
        %1024 = vmatprep.subr.mxu0 0.0
        %1025 = vmatpush1.xpose.msra.mxu0 0.0
        %1026 = vmatprep.subr.mxu0 0.0
        %1027 = vmatpush1.xpose.msra.mxu0 0.0
        %1028 = vmatprep.subr.mxu0 0.0
        %1029 = vmatpush1.xpose.msra.mxu0 0.0
        %1030 = vmatprep.subr.mxu0 0.0
        %1031 = vmatpush1.xpose.msra.mxu0 0.0
        %1032 = vmatprep.mubr.f32.mxu0 0.0
        %1033 = vmatmul.mubr.f32.gmra.mrb[0].mxu0 %v966
        %v1034 = vpop.f32.mrb[0].mxu0
        %v1035 = vadd.f32 0.0, %v1034
        %v1036 = vpop.f32.mrb[0].mxu0
        %1037 = vdwg.mxu0
        %1038 = vmatprep.subr.mxu0 0.0
        %1039 = vmatpush1.xpose.msra.mxu0 %v747
        %1040 = vmatprep.subr.mxu0 0.0
        %1041 = vmatpush1.xpose.msra.mxu0 0.0
        %1042 = vmatprep.subr.mxu0 0.0
        %1043 = vmatpush1.xpose.msra.mxu0 0.0
        %1044 = vmatprep.subr.mxu0 0.0
        %1045 = vmatpush1.xpose.msra.mxu0 0.0
        %1046 = vmatprep.subr.mxu0 0.0
        %1047 = vmatpush1.xpose.msra.mxu0 0.0
        %1048 = vmatprep.subr.mxu0 0.0
        %1049 = vmatpush1.xpose.msra.mxu0 0.0
        %1050 = vmatprep.subr.mxu0 0.0
        %1051 = vmatpush1.xpose.msra.mxu0 0.0
        %1052 = vmatprep.subr.mxu0 0.0
        %1053 = vmatpush1.xpose.msra.mxu0 0.0
        %1054 = vmatprep.subr.mxu0 0.0
        %1055 = vmatpush1.xpose.msra.mxu0 0.0
        %1056 = vmatprep.subr.mxu0 0.0
        %1057 = vmatpush1.xpose.msra.mxu0 0.0
        %1058 = vmatprep.subr.mxu0 0.0
        %1059 = vmatpush1.xpose.msra.mxu0 0.0
        %1060 = vmatprep.subr.mxu0 0.0
        %1061 = vmatpush1.xpose.msra.mxu0 0.0
        %1062 = vmatprep.subr.mxu0 0.0
        %1063 = vmatpush1.xpose.msra.mxu0 0.0
        %1064 = vmatprep.subr.mxu0 0.0
        %1065 = vmatpush1.xpose.msra.mxu0 0.0
        %1066 = vmatprep.subr.mxu0 0.0
        %1067 = vmatpush1.xpose.msra.mxu0 0.0
        %1068 = vmatprep.subr.mxu0 0.0
        %1069 = vmatpush1.xpose.msra.mxu0 0.0
        %1070 = vmatprep.subr.mxu0 0.0
        %1071 = vmatpush1.xpose.msra.mxu0 0.0
        %1072 = vmatprep.subr.mxu0 0.0
        %1073 = vmatpush1.xpose.msra.mxu0 0.0
        %1074 = vmatprep.subr.mxu0 0.0
        %1075 = vmatpush1.xpose.msra.mxu0 0.0
        %1076 = vmatprep.subr.mxu0 0.0
        %1077 = vmatpush1.xpose.msra.mxu0 0.0
        %1078 = vmatprep.subr.mxu0 0.0
        %1079 = vmatpush1.xpose.msra.mxu0 0.0
        %1080 = vmatprep.subr.mxu0 0.0
        %1081 = vmatpush1.xpose.msra.mxu0 0.0
        %1082 = vmatprep.subr.mxu0 0.0
        %1083 = vmatpush1.xpose.msra.mxu0 0.0
        %1084 = vmatprep.subr.mxu0 0.0
        %1085 = vmatpush1.xpose.msra.mxu0 0.0
        %1086 = vmatprep.subr.mxu0 0.0
        %1087 = vmatpush1.xpose.msra.mxu0 0.0
        %1088 = vmatprep.subr.mxu0 0.0
        %1089 = vmatpush1.xpose.msra.mxu0 0.0
        %1090 = vmatprep.subr.mxu0 0.0
        %1091 = vmatpush1.xpose.msra.mxu0 0.0
        %1092 = vmatprep.subr.mxu0 0.0
        %1093 = vmatpush1.xpose.msra.mxu0 0.0
        %1094 = vmatprep.subr.mxu0 0.0
        %1095 = vmatpush1.xpose.msra.mxu0 0.0
        %1096 = vmatprep.subr.mxu0 0.0
        %1097 = vmatpush1.xpose.msra.mxu0 0.0
        %1098 = vmatprep.subr.mxu0 0.0
        %1099 = vmatpush1.xpose.msra.mxu0 0.0
        %1100 = vmatprep.subr.mxu0 0.0
        %1101 = vmatpush1.xpose.msra.mxu0 0.0
        %1102 = vmatprep.mubr.f32.mxu0 0.0
        %1103 = vmatmul.mubr.f32.gmra.mrb[0].mxu0 %v606
        %v1104 = vpop.f32.mrb[0].mxu0
        %v1105 = vadd.f32 0.0, %v1104
        %v1106 = vpop.f32.mrb[0].mxu0
        %1107 = vmatprep.mubr.f32.mxu0 0.0
        %1108 = vmatmul.mubr.f32.gmra.mrb[0].mxu0 %v609
        %v1109 = vpop.f32.mrb[0].mxu0
        %v1110 = vadd.f32 0.0, %v1109
        %v1111 = vpop.f32.mrb[0].mxu0
        %1112 = vdwg.mxu0
        %1113 = vmatprep.subr.mxu0 0.0
        %1114 = vmatpush1.xpose.msra.mxu0 %v820
        %1115 = vmatprep.subr.mxu0 0.0
        %1116 = vmatpush1.xpose.msra.mxu0 0.0
        %1117 = vmatprep.subr.mxu0 0.0
        %1118 = vmatpush1.xpose.msra.mxu0 0.0
        %1119 = vmatprep.subr.mxu0 0.0
        %1120 = vmatpush1.xpose.msra.mxu0 0.0
        %1121 = vmatprep.subr.mxu0 0.0
        %1122 = vmatpush1.xpose.msra.mxu0 0.0
        %1123 = vmatprep.subr.mxu0 0.0
        %1124 = vmatpush1.xpose.msra.mxu0 0.0
        %1125 = vmatprep.subr.mxu0 0.0
        %1126 = vmatpush1.xpose.msra.mxu0 0.0
        %1127 = vmatprep.subr.mxu0 0.0
        %1128 = vmatpush1.xpose.msra.mxu0 0.0
        %1129 = vmatprep.subr.mxu0 0.0
        %1130 = vmatpush1.xpose.msra.mxu0 0.0
        %1131 = vmatprep.subr.mxu0 0.0
        %1132 = vmatpush1.xpose.msra.mxu0 0.0
        %1133 = vmatprep.subr.mxu0 0.0
        %1134 = vmatpush1.xpose.msra.mxu0 0.0
        %1135 = vmatprep.subr.mxu0 0.0
        %1136 = vmatpush1.xpose.msra.mxu0 0.0
        %1137 = vmatprep.subr.mxu0 0.0
        %1138 = vmatpush1.xpose.msra.mxu0 0.0
        %1139 = vmatprep.subr.mxu0 0.0
        %1140 = vmatpush1.xpose.msra.mxu0 0.0
        %1141 = vmatprep.subr.mxu0 0.0
        %1142 = vmatpush1.xpose.msra.mxu0 0.0
        %1143 = vmatprep.subr.mxu0 0.0
        %1144 = vmatpush1.xpose.msra.mxu0 0.0
        %1145 = vmatprep.subr.mxu0 0.0
        %1146 = vmatpush1.xpose.msra.mxu0 0.0
        %1147 = vmatprep.subr.mxu0 0.0
        %1148 = vmatpush1.xpose.msra.mxu0 0.0
        %1149 = vmatprep.subr.mxu0 0.0
        %1150 = vmatpush1.xpose.msra.mxu0 0.0
        %1151 = vmatprep.subr.mxu0 0.0
        %1152 = vmatpush1.xpose.msra.mxu0 0.0
        %1153 = vmatprep.subr.mxu0 0.0
        %1154 = vmatpush1.xpose.msra.mxu0 0.0
        %1155 = vmatprep.subr.mxu0 0.0
        %1156 = vmatpush1.xpose.msra.mxu0 0.0
        %1157 = vmatprep.subr.mxu0 0.0
        %1158 = vmatpush1.xpose.msra.mxu0 0.0
        %1159 = vmatprep.subr.mxu0 0.0
        %1160 = vmatpush1.xpose.msra.mxu0 0.0
        %1161 = vmatprep.subr.mxu0 0.0
        %1162 = vmatpush1.xpose.msra.mxu0 0.0
        %1163 = vmatprep.subr.mxu0 0.0
        %1164 = vmatpush1.xpose.msra.mxu0 0.0
        %1165 = vmatprep.subr.mxu0 0.0
        %1166 = vmatpush1.xpose.msra.mxu0 0.0
        %1167 = vmatprep.subr.mxu0 0.0
        %1168 = vmatpush1.xpose.msra.mxu0 0.0
        %1169 = vmatprep.subr.mxu0 0.0
        %1170 = vmatpush1.xpose.msra.mxu0 0.0
        %1171 = vmatprep.subr.mxu0 0.0
        %1172 = vmatpush1.xpose.msra.mxu0 0.0
        %1173 = vmatprep.subr.mxu0 0.0
        %1174 = vmatpush1.xpose.msra.mxu0 0.0
        %1175 = vmatprep.subr.mxu0 0.0
        %1176 = vmatpush1.xpose.msra.mxu0 0.0
        %1177 = vmatprep.mubr.f32.mxu0 0.0
        %1178 = vmatmul.mubr.f32.gmra.mrb[0].mxu0 %v612
        %v1179 = vpop.f32.mrb[0].mxu0
        %v1180 = vadd.f32 0.0, %v1179
        %v1181 = vpop.f32.mrb[0].mxu0
        %1182 = vmatprep.mubr.f32.mxu0 0.0
        %1183 = vmatmul.mubr.f32.gmra.mrb[0].mxu0 %v615
        %v1184 = vpop.f32.mrb[0].mxu0
        %v1185 = vadd.f32 0.0, %v1184
        %v1186 = vpop.f32.mrb[0].mxu0
        %1187 = vdwg.mxu0
        %1188 = vmatprep.subr.mxu0 0.0
        %1189 = vmatpush1.xpose.msra.mxu0 %v893
        %1190 = vmatprep.subr.mxu0 0.0
        %1191 = vmatpush1.xpose.msra.mxu0 0.0
        %1192 = vmatprep.subr.mxu0 0.0
        %1193 = vmatpush1.xpose.msra.mxu0 0.0
        %1194 = vmatprep.subr.mxu0 0.0
        %1195 = vmatpush1.xpose.msra.mxu0 0.0
        %1196 = vmatprep.subr.mxu0 0.0
        %1197 = vmatpush1.xpose.msra.mxu0 0.0
        %1198 = vmatprep.subr.mxu0 0.0
        %1199 = vmatpush1.xpose.msra.mxu0 0.0
        %1200 = vmatprep.subr.mxu0 0.0
        %1201 = vmatpush1.xpose.msra.mxu0 0.0
        %1202 = vmatprep.subr.mxu0 0.0
        %1203 = vmatpush1.xpose.msra.mxu0 0.0
        %1204 = vmatprep.subr.mxu0 0.0
        %1205 = vmatpush1.xpose.msra.mxu0 0.0
        %1206 = vmatprep.subr.mxu0 0.0
        %1207 = vmatpush1.xpose.msra.mxu0 0.0
        %1208 = vmatprep.subr.mxu0 0.0
        %1209 = vmatpush1.xpose.msra.mxu0 0.0
        %1210 = vmatprep.subr.mxu0 0.0
        %1211 = vmatpush1.xpose.msra.mxu0 0.0
        %1212 = vmatprep.subr.mxu0 0.0
        %1213 = vmatpush1.xpose.msra.mxu0 0.0
        %1214 = vmatprep.subr.mxu0 0.0
        %1215 = vmatpush1.xpose.msra.mxu0 0.0
        %1216 = vmatprep.subr.mxu0 0.0
        %1217 = vmatpush1.xpose.msra.mxu0 0.0
        %1218 = vmatprep.subr.mxu0 0.0
        %1219 = vmatpush1.xpose.msra.mxu0 0.0
        %1220 = vmatprep.subr.mxu0 0.0
        %1221 = vmatpush1.xpose.msra.mxu0 0.0
        %1222 = vmatprep.subr.mxu0 0.0
        %1223 = vmatpush1.xpose.msra.mxu0 0.0
        %1224 = vmatprep.subr.mxu0 0.0
        %1225 = vmatpush1.xpose.msra.mxu0 0.0
        %1226 = vmatprep.subr.mxu0 0.0
        %1227 = vmatpush1.xpose.msra.mxu0 0.0
        %1228 = vmatprep.subr.mxu0 0.0
        %1229 = vmatpush1.xpose.msra.mxu0 0.0
        %1230 = vmatprep.subr.mxu0 0.0
        %1231 = vmatpush1.xpose.msra.mxu0 0.0
        %1232 = vmatprep.subr.mxu0 0.0
        %1233 = vmatpush1.xpose.msra.mxu0 0.0
        %1234 = vmatprep.subr.mxu0 0.0
        %1235 = vmatpush1.xpose.msra.mxu0 0.0
        %1236 = vmatprep.subr.mxu0 0.0
        %1237 = vmatpush1.xpose.msra.mxu0 0.0
        %1238 = vmatprep.subr.mxu0 0.0
        %1239 = vmatpush1.xpose.msra.mxu0 0.0
        %1240 = vmatprep.subr.mxu0 0.0
        %1241 = vmatpush1.xpose.msra.mxu0 0.0
        %1242 = vmatprep.subr.mxu0 0.0
        %1243 = vmatpush1.xpose.msra.mxu0 0.0
        %1244 = vmatprep.subr.mxu0 0.0
        %1245 = vmatpush1.xpose.msra.mxu0 0.0
        %1246 = vmatprep.subr.mxu0 0.0
        %1247 = vmatpush1.xpose.msra.mxu0 0.0
        %1248 = vmatprep.subr.mxu0 0.0
        %1249 = vmatpush1.xpose.msra.mxu0 0.0
        %1250 = vmatprep.subr.mxu0 0.0
        %1251 = vmatpush1.xpose.msra.mxu0 0.0
        %1252 = vmatprep.mubr.f32.mxu0 0.0
        %1253 = vmatmul.mubr.f32.gmra.mrb[0].mxu0 %v618
        %v1254 = vpop.f32.mrb[0].mxu0
        %v1255 = vadd.f32 0.0, %v1254
        %v1256 = vpop.f32.mrb[0].mxu0
        %1257 = vmatprep.mubr.f32.mxu0 0.0
        %1258 = vmatmul.mubr.f32.gmra.mrb[0].mxu0 %v621
        %v1259 = vpop.f32.mrb[0].mxu0
        %v1260 = vadd.f32 0.0, %v1259
        %v1261 = vpop.f32.mrb[0].mxu0
        %1262 = vdwg.mxu0
        %1263 = vmatprep.subr.mxu0 0.0
        %1264 = vmatpush1.xpose.msra.mxu0 %v966
        %1265 = vmatprep.subr.mxu0 0.0
        %1266 = vmatpush1.xpose.msra.mxu0 0.0
        %1267 = vmatprep.subr.mxu0 0.0
        %1268 = vmatpush1.xpose.msra.mxu0 0.0
        %1269 = vmatprep.subr.mxu0 0.0
        %1270 = vmatpush1.xpose.msra.mxu0 0.0
        %1271 = vmatprep.subr.mxu0 0.0
        %1272 = vmatpush1.xpose.msra.mxu0 0.0
        %1273 = vmatprep.subr.mxu0 0.0
        %1274 = vmatpush1.xpose.msra.mxu0 0.0
        %1275 = vmatprep.subr.mxu0 0.0
        %1276 = vmatpush1.xpose.msra.mxu0 0.0
        %1277 = vmatprep.subr.mxu0 0.0
        %1278 = vmatpush1.xpose.msra.mxu0 0.0
        %1279 = vmatprep.subr.mxu0 0.0
        %1280 = vmatpush1.xpose.msra.mxu0 0.0
        %1281 = vmatprep.subr.mxu0 0.0
        %1282 = vmatpush1.xpose.msra.mxu0 0.0
        %1283 = vmatprep.subr.mxu0 0.0
        %1284 = vmatpush1.xpose.msra.mxu0 0.0
        %1285 = vmatprep.subr.mxu0 0.0
        %1286 = vmatpush1.xpose.msra.mxu0 0.0
        %1287 = vmatprep.subr.mxu0 0.0
        %1288 = vmatpush1.xpose.msra.mxu0 0.0
        %1289 = vmatprep.subr.mxu0 0.0
        %1290 = vmatpush1.xpose.msra.mxu0 0.0
        %1291 = vmatprep.subr.mxu0 0.0
        %1292 = vmatpush1.xpose.msra.mxu0 0.0
        %1293 = vmatprep.subr.mxu0 0.0
        %1294 = vmatpush1.xpose.msra.mxu0 0.0
        %1295 = vmatprep.subr.mxu0 0.0
        %1296 = vmatpush1.xpose.msra.mxu0 0.0
        %1297 = vmatprep.subr.mxu0 0.0
        %1298 = vmatpush1.xpose.msra.mxu0 0.0
        %1299 = vmatprep.subr.mxu0 0.0
        %1300 = vmatpush1.xpose.msra.mxu0 0.0
        %1301 = vmatprep.subr.mxu0 0.0
        %1302 = vmatpush1.xpose.msra.mxu0 0.0
        %1303 = vmatprep.subr.mxu0 0.0
        %1304 = vmatpush1.xpose.msra.mxu0 0.0
        %1305 = vmatprep.subr.mxu0 0.0
        %1306 = vmatpush1.xpose.msra.mxu0 0.0
        %1307 = vmatprep.subr.mxu0 0.0
        %1308 = vmatpush1.xpose.msra.mxu0 0.0
        %1309 = vmatprep.subr.mxu0 0.0
        %1310 = vmatpush1.xpose.msra.mxu0 0.0
        %1311 = vmatprep.subr.mxu0 0.0
        %1312 = vmatpush1.xpose.msra.mxu0 0.0
        %1313 = vmatprep.subr.mxu0 0.0
        %1314 = vmatpush1.xpose.msra.mxu0 0.0
        %1315 = vmatprep.subr.mxu0 0.0
        %1316 = vmatpush1.xpose.msra.mxu0 0.0
        %1317 = vmatprep.subr.mxu0 0.0
        %1318 = vmatpush1.xpose.msra.mxu0 0.0
        %1319 = vmatprep.subr.mxu0 0.0
        %1320 = vmatpush1.xpose.msra.mxu0 0.0
        %1321 = vmatprep.subr.mxu0 0.0
        %1322 = vmatpush1.xpose.msra.mxu0 0.0
        %1323 = vmatprep.subr.mxu0 0.0
        %1324 = vmatpush1.xpose.msra.mxu0 0.0
        %1325 = vmatprep.subr.mxu0 0.0
        %1326 = vmatpush1.xpose.msra.mxu0 0.0
        %1327 = vmatprep.mubr.f32.mxu0 0.0
        %1328 = vmatmul.mubr.f32.gmra.mrb[0].mxu0 %v624
        %v1329 = vpop.f32.mrb[0].mxu0
        %v1330 = vadd.f32 0.0, %v1329
        %v1331 = vpop.f32.mrb[0].mxu0
        %1332 = vmatprep.mubr.f32.mxu0 0.0
        %1333 = vmatmul.mubr.f32.gmra.mrb[0].mxu0 %v627
        %v1334 = vpop.f32.mrb[0].mxu0
        %v1335 = vadd.f32 0.0, %v1334
        %v1336 = vpop.f32.mrb[0].mxu0
        %1337 = vdwg.mxu0
        %vm1338 = vcmask 64512
        %v1340 = vsel %vm1338, %v1105, 0
        %v1343 = vsel %vm1338, %v1110, 0
        %1345 = vmatprep.subr.mxu0 0.0
        %1346 = vmatpush1.msra.mxu0 %v587
        %1347 = vmatprep.subr.mxu0 0.0
        %1348 = vmatpush1.msra.mxu0 0.0
        %1349 = vmatprep.subr.mxu0 0.0
        %1350 = vmatpush1.msra.mxu0 0.0
        %1351 = vmatprep.subr.mxu0 0.0
        %1352 = vmatpush1.msra.mxu0 0.0
        %1353 = vmatprep.subr.mxu0 0.0
        %1354 = vmatpush1.msra.mxu0 0.0
        %1355 = vmatprep.subr.mxu0 0.0
        %1356 = vmatpush1.msra.mxu0 0.0
        %1357 = vmatprep.subr.mxu0 0.0
        %1358 = vmatpush1.msra.mxu0 0.0
        %1359 = vmatprep.subr.mxu0 0.0
        %1360 = vmatpush1.msra.mxu0 0.0
        %1361 = vmatprep.subr.mxu0 0.0
        %1362 = vmatpush1.msra.mxu0 0.0
        %1363 = vmatprep.subr.mxu0 0.0
        %1364 = vmatpush1.msra.mxu0 0.0
        %1365 = vmatprep.subr.mxu0 0.0
        %1366 = vmatpush1.msra.mxu0 0.0
        %1367 = vmatprep.subr.mxu0 0.0
        %1368 = vmatpush1.msra.mxu0 0.0
        %1369 = vmatprep.subr.mxu0 0.0
        %1370 = vmatpush1.msra.mxu0 0.0
        %1371 = vmatprep.subr.mxu0 0.0
        %1372 = vmatpush1.msra.mxu0 0.0
        %1373 = vmatprep.subr.mxu0 0.0
        %1374 = vmatpush1.msra.mxu0 0.0
        %1375 = vmatprep.subr.mxu0 0.0
        %1376 = vmatpush1.msra.mxu0 0.0
        %1377 = vmatprep.subr.mxu0 0.0
        %1378 = vmatpush1.msra.mxu0 0.0
        %1379 = vmatprep.subr.mxu0 0.0
        %1380 = vmatpush1.msra.mxu0 0.0
        %1381 = vmatprep.subr.mxu0 0.0
        %1382 = vmatpush1.msra.mxu0 0.0
        %1383 = vmatprep.subr.mxu0 0.0
        %1384 = vmatpush1.msra.mxu0 0.0
        %1385 = vmatprep.subr.mxu0 0.0
        %1386 = vmatpush1.msra.mxu0 0.0
        %1387 = vmatprep.subr.mxu0 0.0
        %1388 = vmatpush1.msra.mxu0 0.0
        %1389 = vmatprep.subr.mxu0 0.0
        %1390 = vmatpush1.msra.mxu0 0.0
        %1391 = vmatprep.subr.mxu0 0.0
        %1392 = vmatpush1.msra.mxu0 0.0
        %1393 = vmatprep.subr.mxu0 0.0
        %1394 = vmatpush1.msra.mxu0 0.0
        %1395 = vmatprep.subr.mxu0 0.0
        %1396 = vmatpush1.msra.mxu0 0.0
        %1397 = vmatprep.subr.mxu0 0.0
        %1398 = vmatpush1.msra.mxu0 0.0
        %1399 = vmatprep.subr.mxu0 0.0
        %1400 = vmatpush1.msra.mxu0 0.0
        %1401 = vmatprep.subr.mxu0 0.0
        %1402 = vmatpush1.msra.mxu0 0.0
        %1403 = vmatprep.subr.mxu0 0.0
        %1404 = vmatpush1.msra.mxu0 0.0
        %1405 = vmatprep.subr.mxu0 0.0
        %1406 = vmatpush1.msra.mxu0 0.0
        %1407 = vmatprep.subr.mxu0 0.0
        %1408 = vmatpush1.msra.mxu0 0.0
        %1409 = vmatprep.mubr.f32.mxu0 0.0
        %1410 = vmatmul.mubr.f32.gmra.mrb[0].mxu0 %v1340
        %v1411 = vpop.f32.mrb[0].mxu0
        %v1412 = vadd.f32 0.0, %v1411
        %v1413 = vpop.f32.mrb[0].mxu0
        %1414 = vmatprep.mubr.f32.mxu0 0.0
        %1415 = vmatmul.mubr.f32.gmra.mrb[0].mxu0 %v1343
        %v1416 = vpop.f32.mrb[0].mxu0
        %v1417 = vadd.f32 0.0, %v1416
        %v1418 = vpop.f32.mrb[0].mxu0
        %1419 = vdwg.mxu0
        %v1421 = vsel %vm1338, %v1180, 0
        %v1424 = vsel %vm1338, %v1185, 0
        %1426 = vmatprep.subr.mxu0 0.0
        %1427 = vmatpush1.msra.mxu0 %v592
        %1428 = vmatprep.subr.mxu0 0.0
        %1429 = vmatpush1.msra.mxu0 0.0
        %1430 = vmatprep.subr.mxu0 0.0
        %1431 = vmatpush1.msra.mxu0 0.0
        %1432 = vmatprep.subr.mxu0 0.0
        %1433 = vmatpush1.msra.mxu0 0.0
        %1434 = vmatprep.subr.mxu0 0.0
        %1435 = vmatpush1.msra.mxu0 0.0
        %1436 = vmatprep.subr.mxu0 0.0
        %1437 = vmatpush1.msra.mxu0 0.0
        %1438 = vmatprep.subr.mxu0 0.0
        %1439 = vmatpush1.msra.mxu0 0.0
        %1440 = vmatprep.subr.mxu0 0.0
        %1441 = vmatpush1.msra.mxu0 0.0
        %1442 = vmatprep.subr.mxu0 0.0
        %1443 = vmatpush1.msra.mxu0 0.0
        %1444 = vmatprep.subr.mxu0 0.0
        %1445 = vmatpush1.msra.mxu0 0.0
        %1446 = vmatprep.subr.mxu0 0.0
        %1447 = vmatpush1.msra.mxu0 0.0
        %1448 = vmatprep.subr.mxu0 0.0
        %1449 = vmatpush1.msra.mxu0 0.0
        %1450 = vmatprep.subr.mxu0 0.0
        %1451 = vmatpush1.msra.mxu0 0.0
        %1452 = vmatprep.subr.mxu0 0.0
        %1453 = vmatpush1.msra.mxu0 0.0
        %1454 = vmatprep.subr.mxu0 0.0
        %1455 = vmatpush1.msra.mxu0 0.0
        %1456 = vmatprep.subr.mxu0 0.0
        %1457 = vmatpush1.msra.mxu0 0.0
        %1458 = vmatprep.subr.mxu0 0.0
        %1459 = vmatpush1.msra.mxu0 0.0
        %1460 = vmatprep.subr.mxu0 0.0
        %1461 = vmatpush1.msra.mxu0 0.0
        %1462 = vmatprep.subr.mxu0 0.0
        %1463 = vmatpush1.msra.mxu0 0.0
        %1464 = vmatprep.subr.mxu0 0.0
        %1465 = vmatpush1.msra.mxu0 0.0
        %1466 = vmatprep.subr.mxu0 0.0
        %1467 = vmatpush1.msra.mxu0 0.0
        %1468 = vmatprep.subr.mxu0 0.0
        %1469 = vmatpush1.msra.mxu0 0.0
        %1470 = vmatprep.subr.mxu0 0.0
        %1471 = vmatpush1.msra.mxu0 0.0
        %1472 = vmatprep.subr.mxu0 0.0
        %1473 = vmatpush1.msra.mxu0 0.0
        %1474 = vmatprep.subr.mxu0 0.0
        %1475 = vmatpush1.msra.mxu0 0.0
        %1476 = vmatprep.subr.mxu0 0.0
        %1477 = vmatpush1.msra.mxu0 0.0
        %1478 = vmatprep.subr.mxu0 0.0
        %1479 = vmatpush1.msra.mxu0 0.0
        %1480 = vmatprep.subr.mxu0 0.0
        %1481 = vmatpush1.msra.mxu0 0.0
        %1482 = vmatprep.subr.mxu0 0.0
        %1483 = vmatpush1.msra.mxu0 0.0
        %1484 = vmatprep.subr.mxu0 0.0
        %1485 = vmatpush1.msra.mxu0 0.0
        %1486 = vmatprep.subr.mxu0 0.0
        %1487 = vmatpush1.msra.mxu0 0.0
        %1488 = vmatprep.subr.mxu0 0.0
        %1489 = vmatpush1.msra.mxu0 0.0
        %1490 = vmatprep.mubr.f32.mxu0 0.0
        %1491 = vmatmul.mubr.f32.gmra.mrb[0].mxu0 %v1421
        %v1492 = vpop.f32.mrb[0].mxu0
        %v1493 = vadd.f32 0.0, %v1492
        %v1494 = vpop.f32.mrb[0].mxu0
        %1495 = vmatprep.mubr.f32.mxu0 0.0
        %1496 = vmatmul.mubr.f32.gmra.mrb[0].mxu0 %v1424
        %v1497 = vpop.f32.mrb[0].mxu0
        %v1498 = vadd.f32 0.0, %v1497
        %v1499 = vpop.f32.mrb[0].mxu0
        %1500 = vdwg.mxu0
        %v1502 = vsel %vm1338, %v1255, 0
        %v1505 = vsel %vm1338, %v1260, 0
        %1507 = vmatprep.subr.mxu0 0.0
        %1508 = vmatpush1.msra.mxu0 %v597
        %1509 = vmatprep.subr.mxu0 0.0
        %1510 = vmatpush1.msra.mxu0 0.0
        %1511 = vmatprep.subr.mxu0 0.0
        %1512 = vmatpush1.msra.mxu0 0.0
        %1513 = vmatprep.subr.mxu0 0.0
        %1514 = vmatpush1.msra.mxu0 0.0
        %1515 = vmatprep.subr.mxu0 0.0
        %1516 = vmatpush1.msra.mxu0 0.0
        %1517 = vmatprep.subr.mxu0 0.0
        %1518 = vmatpush1.msra.mxu0 0.0
        %1519 = vmatprep.subr.mxu0 0.0
        %1520 = vmatpush1.msra.mxu0 0.0
        %1521 = vmatprep.subr.mxu0 0.0
        %1522 = vmatpush1.msra.mxu0 0.0
        %1523 = vmatprep.subr.mxu0 0.0
        %1524 = vmatpush1.msra.mxu0 0.0
        %1525 = vmatprep.subr.mxu0 0.0
        %1526 = vmatpush1.msra.mxu0 0.0
        %1527 = vmatprep.subr.mxu0 0.0
        %1528 = vmatpush1.msra.mxu0 0.0
        %1529 = vmatprep.subr.mxu0 0.0
        %1530 = vmatpush1.msra.mxu0 0.0
        %1531 = vmatprep.subr.mxu0 0.0
        %1532 = vmatpush1.msra.mxu0 0.0
        %1533 = vmatprep.subr.mxu0 0.0
        %1534 = vmatpush1.msra.mxu0 0.0
        %1535 = vmatprep.subr.mxu0 0.0
        %1536 = vmatpush1.msra.mxu0 0.0
        %1537 = vmatprep.subr.mxu0 0.0
        %1538 = vmatpush1.msra.mxu0 0.0
        %1539 = vmatprep.subr.mxu0 0.0
        %1540 = vmatpush1.msra.mxu0 0.0
        %1541 = vmatprep.subr.mxu0 0.0
        %1542 = vmatpush1.msra.mxu0 0.0
        %1543 = vmatprep.subr.mxu0 0.0
        %1544 = vmatpush1.msra.mxu0 0.0
        %1545 = vmatprep.subr.mxu0 0.0
        %1546 = vmatpush1.msra.mxu0 0.0
        %1547 = vmatprep.subr.mxu0 0.0
        %1548 = vmatpush1.msra.mxu0 0.0
        %1549 = vmatprep.subr.mxu0 0.0
        %1550 = vmatpush1.msra.mxu0 0.0
        %1551 = vmatprep.subr.mxu0 0.0
        %1552 = vmatpush1.msra.mxu0 0.0
        %1553 = vmatprep.subr.mxu0 0.0
        %1554 = vmatpush1.msra.mxu0 0.0
        %1555 = vmatprep.subr.mxu0 0.0
        %1556 = vmatpush1.msra.mxu0 0.0
        %1557 = vmatprep.subr.mxu0 0.0
        %1558 = vmatpush1.msra.mxu0 0.0
        %1559 = vmatprep.subr.mxu0 0.0
        %1560 = vmatpush1.msra.mxu0 0.0
        %1561 = vmatprep.subr.mxu0 0.0
        %1562 = vmatpush1.msra.mxu0 0.0
        %1563 = vmatprep.subr.mxu0 0.0
        %1564 = vmatpush1.msra.mxu0 0.0
        %1565 = vmatprep.subr.mxu0 0.0
        %1566 = vmatpush1.msra.mxu0 0.0
        %1567 = vmatprep.subr.mxu0 0.0
        %1568 = vmatpush1.msra.mxu0 0.0
        %1569 = vmatprep.subr.mxu0 0.0
        %1570 = vmatpush1.msra.mxu0 0.0
        %1571 = vmatprep.mubr.f32.mxu0 0.0
        %1572 = vmatmul.mubr.f32.gmra.mrb[0].mxu0 %v1502
        %v1573 = vpop.f32.mrb[0].mxu0
        %v1574 = vadd.f32 0.0, %v1573
        %v1575 = vpop.f32.mrb[0].mxu0
        %1576 = vmatprep.mubr.f32.mxu0 0.0
        %1577 = vmatmul.mubr.f32.gmra.mrb[0].mxu0 %v1505
        %v1578 = vpop.f32.mrb[0].mxu0
        %v1579 = vadd.f32 0.0, %v1578
        %v1580 = vpop.f32.mrb[0].mxu0
        %1581 = vdwg.mxu0
        %v1583 = vsel %vm1338, %v1330, 0
        %v1586 = vsel %vm1338, %v1335, 0
        %1588 = vmatprep.subr.mxu0 0.0
        %1589 = vmatpush1.msra.mxu0 %v602
        %1590 = vmatprep.subr.mxu0 0.0
        %1591 = vmatpush1.msra.mxu0 0.0
        %1592 = vmatprep.subr.mxu0 0.0
        %1593 = vmatpush1.msra.mxu0 0.0
        %1594 = vmatprep.subr.mxu0 0.0
        %1595 = vmatpush1.msra.mxu0 0.0
        %1596 = vmatprep.subr.mxu0 0.0
        %1597 = vmatpush1.msra.mxu0 0.0
        %1598 = vmatprep.subr.mxu0 0.0
        %1599 = vmatpush1.msra.mxu0 0.0
        %1600 = vmatprep.subr.mxu0 0.0
        %1601 = vmatpush1.msra.mxu0 0.0
        %1602 = vmatprep.subr.mxu0 0.0
        %1603 = vmatpush1.msra.mxu0 0.0
        %1604 = vmatprep.subr.mxu0 0.0
        %1605 = vmatpush1.msra.mxu0 0.0
        %1606 = vmatprep.subr.mxu0 0.0
        %1607 = vmatpush1.msra.mxu0 0.0
        %1608 = vmatprep.subr.mxu0 0.0
        %1609 = vmatpush1.msra.mxu0 0.0
        %1610 = vmatprep.subr.mxu0 0.0
        %1611 = vmatpush1.msra.mxu0 0.0
        %1612 = vmatprep.subr.mxu0 0.0
        %1613 = vmatpush1.msra.mxu0 0.0
        %1614 = vmatprep.subr.mxu0 0.0
        %1615 = vmatpush1.msra.mxu0 0.0
        %1616 = vmatprep.subr.mxu0 0.0
        %1617 = vmatpush1.msra.mxu0 0.0
        %1618 = vmatprep.subr.mxu0 0.0
        %1619 = vmatpush1.msra.mxu0 0.0
        %1620 = vmatprep.subr.mxu0 0.0
        %1621 = vmatpush1.msra.mxu0 0.0
        %1622 = vmatprep.subr.mxu0 0.0
        %1623 = vmatpush1.msra.mxu0 0.0
        %1624 = vmatprep.subr.mxu0 0.0
        %1625 = vmatpush1.msra.mxu0 0.0
        %1626 = vmatprep.subr.mxu0 0.0
        %1627 = vmatpush1.msra.mxu0 0.0
        %1628 = vmatprep.subr.mxu0 0.0
        %1629 = vmatpush1.msra.mxu0 0.0
        %1630 = vmatprep.subr.mxu0 0.0
        %1631 = vmatpush1.msra.mxu0 0.0
        %1632 = vmatprep.subr.mxu0 0.0
        %1633 = vmatpush1.msra.mxu0 0.0
        %1634 = vmatprep.subr.mxu0 0.0
        %1635 = vmatpush1.msra.mxu0 0.0
        %1636 = vmatprep.subr.mxu0 0.0
        %1637 = vmatpush1.msra.mxu0 0.0
        %1638 = vmatprep.subr.mxu0 0.0
        %1639 = vmatpush1.msra.mxu0 0.0
        %1640 = vmatprep.subr.mxu0 0.0
        %1641 = vmatpush1.msra.mxu0 0.0
        %1642 = vmatprep.subr.mxu0 0.0
        %1643 = vmatpush1.msra.mxu0 0.0
        %1644 = vmatprep.subr.mxu0 0.0
        %1645 = vmatpush1.msra.mxu0 0.0
        %1646 = vmatprep.subr.mxu0 0.0
        %1647 = vmatpush1.msra.mxu0 0.0
        %1648 = vmatprep.subr.mxu0 0.0
        %1649 = vmatpush1.msra.mxu0 0.0
        %1650 = vmatprep.subr.mxu0 0.0
        %1651 = vmatpush1.msra.mxu0 0.0
        %1652 = vmatprep.mubr.f32.mxu0 0.0
        %1653 = vmatmul.mubr.f32.gmra.mrb[0].mxu0 %v1583
        %v1654 = vpop.f32.mrb[0].mxu0
        %v1655 = vadd.f32 0.0, %v1654
        %v1656 = vpop.f32.mrb[0].mxu0
        %1657 = vmatprep.mubr.f32.mxu0 0.0
        %1658 = vmatmul.mubr.f32.gmra.mrb[0].mxu0 %v1586
        %v1659 = vpop.f32.mrb[0].mxu0
        %v1660 = vadd.f32 0.0, %v1659
        %v1661 = vpop.f32.mrb[0].mxu0
        %1662 = vdwg.mxu0
        %v1663 = vadd.f32 %v708, %v1412
        %v1664 = vadd.f32 %v713, %v1417
        %v1665 = vadd.f32 %v718, %v1493
        %v1666 = vadd.f32 %v723, %v1498
        %v1667 = vadd.f32 %v728, %v1574
        %v1668 = vadd.f32 %v733, %v1579
        %v1669 = vadd.f32 %v738, %v1655
        %v1670 = vadd.f32 %v743, %v1660
        %v1671 = vtanh.pop %v1663
        %v1672 = vtanh.pop %v1664
        %v1673 = vtanh.pop %v1665
        %v1674 = vtanh.pop %v1666
        %v1675 = vtanh.pop %v1667
        %v1676 = vtanh.pop %v1668
        %v1677 = vtanh.pop %v1669
        %v1678 = vtanh.pop %v1670
        %vm1679 = vcmask 130048
        %v1681 = vsel %vm1679, %v816, 0
        %1683 = vmatprep.subr.mxu0 0.0
        %1684 = vmatpush1.msra.mxu0 %v708
        %1685 = vmatprep.subr.mxu0 0.0
        %1686 = vmatpush1.msra.mxu0 %v713
        %1687 = vmatprep.subr.mxu0 0.0
        %1688 = vmatpush1.msra.mxu0 0.0
        %1689 = vmatprep.subr.mxu0 0.0
        %1690 = vmatpush1.msra.mxu0 0.0
        %1691 = vmatprep.subr.mxu0 0.0
        %1692 = vmatpush1.msra.mxu0 0.0
        %1693 = vmatprep.subr.mxu0 0.0
        %1694 = vmatpush1.msra.mxu0 0.0
        %1695 = vmatprep.subr.mxu0 0.0
        %1696 = vmatpush1.msra.mxu0 0.0
        %1697 = vmatprep.subr.mxu0 0.0
        %1698 = vmatpush1.msra.mxu0 0.0
        %1699 = vmatprep.subr.mxu0 0.0
        %1700 = vmatpush1.msra.mxu0 0.0
        %1701 = vmatprep.subr.mxu0 0.0
        %1702 = vmatpush1.msra.mxu0 0.0
        %1703 = vmatprep.subr.mxu0 0.0
        %1704 = vmatpush1.msra.mxu0 0.0
        %1705 = vmatprep.subr.mxu0 0.0
        %1706 = vmatpush1.msra.mxu0 0.0
        %1707 = vmatprep.subr.mxu0 0.0
        %1708 = vmatpush1.msra.mxu0 0.0
        %1709 = vmatprep.subr.mxu0 0.0
        %1710 = vmatpush1.msra.mxu0 0.0
        %1711 = vmatprep.subr.mxu0 0.0
        %1712 = vmatpush1.msra.mxu0 0.0
        %1713 = vmatprep.subr.mxu0 0.0
        %1714 = vmatpush1.msra.mxu0 0.0
        %1715 = vmatprep.subr.mxu0 0.0
        %1716 = vmatpush1.msra.mxu0 0.0
        %1717 = vmatprep.subr.mxu0 0.0
        %1718 = vmatpush1.msra.mxu0 0.0
        %1719 = vmatprep.subr.mxu0 0.0
        %1720 = vmatpush1.msra.mxu0 0.0
        %1721 = vmatprep.subr.mxu0 0.0
        %1722 = vmatpush1.msra.mxu0 0.0
        %1723 = vmatprep.subr.mxu0 0.0
        %1724 = vmatpush1.msra.mxu0 0.0
        %1725 = vmatprep.subr.mxu0 0.0
        %1726 = vmatpush1.msra.mxu0 0.0
        %1727 = vmatprep.subr.mxu0 0.0
        %1728 = vmatpush1.msra.mxu0 0.0
        %1729 = vmatprep.subr.mxu0 0.0
        %1730 = vmatpush1.msra.mxu0 0.0
        %1731 = vmatprep.subr.mxu0 0.0
        %1732 = vmatpush1.msra.mxu0 0.0
        %1733 = vmatprep.subr.mxu0 0.0
        %1734 = vmatpush1.msra.mxu0 0.0
        %1735 = vmatprep.subr.mxu0 0.0
        %1736 = vmatpush1.msra.mxu0 0.0
        %1737 = vmatprep.subr.mxu0 0.0
        %1738 = vmatpush1.msra.mxu0 0.0
        %1739 = vmatprep.subr.mxu0 0.0
        %1740 = vmatpush1.msra.mxu0 0.0
        %1741 = vmatprep.subr.mxu0 0.0
        %1742 = vmatpush1.msra.mxu0 0.0
        %1743 = vmatprep.subr.mxu0 0.0
        %1744 = vmatpush1.msra.mxu0 0.0
        %1745 = vmatprep.subr.mxu0 0.0
        %1746 = vmatpush1.msra.mxu0 0.0
        %1747 = vmatprep.mubr.f32.mxu0 0.0
        %1748 = vmatmul.mubr.f32.gmra.mrb[0].mxu0 %v1681
        %v1749 = vpop.f32.mrb[0].mxu0
        %v1750 = vadd.f32 0.0, %v1749
        %v1751 = vpop.f32.mrb[0].mxu0
        %1752 = vdwg.mxu0
        %v1754 = vsel %vm1679, %v889, 0
        %1756 = vmatprep.subr.mxu0 0.0
        %1757 = vmatpush1.msra.mxu0 %v718
        %1758 = vmatprep.subr.mxu0 0.0
        %1759 = vmatpush1.msra.mxu0 %v723
        %1760 = vmatprep.subr.mxu0 0.0
        %1761 = vmatpush1.msra.mxu0 0.0
        %1762 = vmatprep.subr.mxu0 0.0
        %1763 = vmatpush1.msra.mxu0 0.0
        %1764 = vmatprep.subr.mxu0 0.0
        %1765 = vmatpush1.msra.mxu0 0.0
        %1766 = vmatprep.subr.mxu0 0.0
        %1767 = vmatpush1.msra.mxu0 0.0
        %1768 = vmatprep.subr.mxu0 0.0
        %1769 = vmatpush1.msra.mxu0 0.0
        %1770 = vmatprep.subr.mxu0 0.0
        %1771 = vmatpush1.msra.mxu0 0.0
        %1772 = vmatprep.subr.mxu0 0.0
        %1773 = vmatpush1.msra.mxu0 0.0
        %1774 = vmatprep.subr.mxu0 0.0
        %1775 = vmatpush1.msra.mxu0 0.0
        %1776 = vmatprep.subr.mxu0 0.0
        %1777 = vmatpush1.msra.mxu0 0.0
        %1778 = vmatprep.subr.mxu0 0.0
        %1779 = vmatpush1.msra.mxu0 0.0
        %1780 = vmatprep.subr.mxu0 0.0
        %1781 = vmatpush1.msra.mxu0 0.0
        %1782 = vmatprep.subr.mxu0 0.0
        %1783 = vmatpush1.msra.mxu0 0.0
        %1784 = vmatprep.subr.mxu0 0.0
        %1785 = vmatpush1.msra.mxu0 0.0
        %1786 = vmatprep.subr.mxu0 0.0
        %1787 = vmatpush1.msra.mxu0 0.0
        %1788 = vmatprep.subr.mxu0 0.0
        %1789 = vmatpush1.msra.mxu0 0.0
        %1790 = vmatprep.subr.mxu0 0.0
        %1791 = vmatpush1.msra.mxu0 0.0
        %1792 = vmatprep.subr.mxu0 0.0
        %1793 = vmatpush1.msra.mxu0 0.0
        %1794 = vmatprep.subr.mxu0 0.0
        %1795 = vmatpush1.msra.mxu0 0.0
        %1796 = vmatprep.subr.mxu0 0.0
        %1797 = vmatpush1.msra.mxu0 0.0
        %1798 = vmatprep.subr.mxu0 0.0
        %1799 = vmatpush1.msra.mxu0 0.0
        %1800 = vmatprep.subr.mxu0 0.0
        %1801 = vmatpush1.msra.mxu0 0.0
        %1802 = vmatprep.subr.mxu0 0.0
        %1803 = vmatpush1.msra.mxu0 0.0
        %1804 = vmatprep.subr.mxu0 0.0
        %1805 = vmatpush1.msra.mxu0 0.0
        %1806 = vmatprep.subr.mxu0 0.0
        %1807 = vmatpush1.msra.mxu0 0.0
        %1808 = vmatprep.subr.mxu0 0.0
        %1809 = vmatpush1.msra.mxu0 0.0
        %1810 = vmatprep.subr.mxu0 0.0
        %1811 = vmatpush1.msra.mxu0 0.0
        %1812 = vmatprep.subr.mxu0 0.0
        %1813 = vmatpush1.msra.mxu0 0.0
        %1814 = vmatprep.subr.mxu0 0.0
        %1815 = vmatpush1.msra.mxu0 0.0
        %1816 = vmatprep.subr.mxu0 0.0
        %1817 = vmatpush1.msra.mxu0 0.0
        %1818 = vmatprep.subr.mxu0 0.0
        %1819 = vmatpush1.msra.mxu0 0.0
        %1820 = vmatprep.mubr.f32.mxu0 0.0
        %1821 = vmatmul.mubr.f32.gmra.mrb[0].mxu0 %v1754
        %v1822 = vpop.f32.mrb[0].mxu0
        %v1823 = vadd.f32 0.0, %v1822
        %v1824 = vpop.f32.mrb[0].mxu0
        %1825 = vdwg.mxu0
        %v1827 = vsel %vm1679, %v962, 0
        %1829 = vmatprep.subr.mxu0 0.0
        %1830 = vmatpush1.msra.mxu0 %v728
        %1831 = vmatprep.subr.mxu0 0.0
        %1832 = vmatpush1.msra.mxu0 %v733
        %1833 = vmatprep.subr.mxu0 0.0
        %1834 = vmatpush1.msra.mxu0 0.0
        %1835 = vmatprep.subr.mxu0 0.0
        %1836 = vmatpush1.msra.mxu0 0.0
        %1837 = vmatprep.subr.mxu0 0.0
        %1838 = vmatpush1.msra.mxu0 0.0
        %1839 = vmatprep.subr.mxu0 0.0
        %1840 = vmatpush1.msra.mxu0 0.0
        %1841 = vmatprep.subr.mxu0 0.0
        %1842 = vmatpush1.msra.mxu0 0.0
        %1843 = vmatprep.subr.mxu0 0.0
        %1844 = vmatpush1.msra.mxu0 0.0
        %1845 = vmatprep.subr.mxu0 0.0
        %1846 = vmatpush1.msra.mxu0 0.0
        %1847 = vmatprep.subr.mxu0 0.0
        %1848 = vmatpush1.msra.mxu0 0.0
        %1849 = vmatprep.subr.mxu0 0.0
        %1850 = vmatpush1.msra.mxu0 0.0
        %1851 = vmatprep.subr.mxu0 0.0
        %1852 = vmatpush1.msra.mxu0 0.0
        %1853 = vmatprep.subr.mxu0 0.0
        %1854 = vmatpush1.msra.mxu0 0.0
        %1855 = vmatprep.subr.mxu0 0.0
        %1856 = vmatpush1.msra.mxu0 0.0
        %1857 = vmatprep.subr.mxu0 0.0
        %1858 = vmatpush1.msra.mxu0 0.0
        %1859 = vmatprep.subr.mxu0 0.0
        %1860 = vmatpush1.msra.mxu0 0.0
        %1861 = vmatprep.subr.mxu0 0.0
        %1862 = vmatpush1.msra.mxu0 0.0
        %1863 = vmatprep.subr.mxu0 0.0
        %1864 = vmatpush1.msra.mxu0 0.0
        %1865 = vmatprep.subr.mxu0 0.0
        %1866 = vmatpush1.msra.mxu0 0.0
        %1867 = vmatprep.subr.mxu0 0.0
        %1868 = vmatpush1.msra.mxu0 0.0
        %1869 = vmatprep.subr.mxu0 0.0
        %1870 = vmatpush1.msra.mxu0 0.0
        %1871 = vmatprep.subr.mxu0 0.0
        %1872 = vmatpush1.msra.mxu0 0.0
        %1873 = vmatprep.subr.mxu0 0.0
        %1874 = vmatpush1.msra.mxu0 0.0
        %1875 = vmatprep.subr.mxu0 0.0
        %1876 = vmatpush1.msra.mxu0 0.0
        %1877 = vmatprep.subr.mxu0 0.0
        %1878 = vmatpush1.msra.mxu0 0.0
        %1879 = vmatprep.subr.mxu0 0.0
        %1880 = vmatpush1.msra.mxu0 0.0
        %1881 = vmatprep.subr.mxu0 0.0
        %1882 = vmatpush1.msra.mxu0 0.0
        %1883 = vmatprep.subr.mxu0 0.0
        %1884 = vmatpush1.msra.mxu0 0.0
        %1885 = vmatprep.subr.mxu0 0.0
        %1886 = vmatpush1.msra.mxu0 0.0
        %1887 = vmatprep.subr.mxu0 0.0
        %1888 = vmatpush1.msra.mxu0 0.0
        %1889 = vmatprep.subr.mxu0 0.0
        %1890 = vmatpush1.msra.mxu0 0.0
        %1891 = vmatprep.subr.mxu0 0.0
        %1892 = vmatpush1.msra.mxu0 0.0
        %1893 = vmatprep.mubr.f32.mxu0 0.0
        %1894 = vmatmul.mubr.f32.gmra.mrb[0].mxu0 %v1827
        %v1895 = vpop.f32.mrb[0].mxu0
        %v1896 = vadd.f32 0.0, %v1895
        %v1897 = vpop.f32.mrb[0].mxu0
        %1898 = vdwg.mxu0
        %v1900 = vsel %vm1679, %v1035, 0
        %1902 = vmatprep.subr.mxu0 0.0
        %1903 = vmatpush1.msra.mxu0 %v738
        %1904 = vmatprep.subr.mxu0 0.0
        %1905 = vmatpush1.msra.mxu0 %v743
        %1906 = vmatprep.subr.mxu0 0.0
        %1907 = vmatpush1.msra.mxu0 0.0
        %1908 = vmatprep.subr.mxu0 0.0
        %1909 = vmatpush1.msra.mxu0 0.0
        %1910 = vmatprep.subr.mxu0 0.0
        %1911 = vmatpush1.msra.mxu0 0.0
        %1912 = vmatprep.subr.mxu0 0.0
        %1913 = vmatpush1.msra.mxu0 0.0
        %1914 = vmatprep.subr.mxu0 0.0
        %1915 = vmatpush1.msra.mxu0 0.0
        %1916 = vmatprep.subr.mxu0 0.0
        %1917 = vmatpush1.msra.mxu0 0.0
        %1918 = vmatprep.subr.mxu0 0.0
        %1919 = vmatpush1.msra.mxu0 0.0
        %1920 = vmatprep.subr.mxu0 0.0
        %1921 = vmatpush1.msra.mxu0 0.0
        %1922 = vmatprep.subr.mxu0 0.0
        %1923 = vmatpush1.msra.mxu0 0.0
        %1924 = vmatprep.subr.mxu0 0.0
        %1925 = vmatpush1.msra.mxu0 0.0
        %1926 = vmatprep.subr.mxu0 0.0
        %1927 = vmatpush1.msra.mxu0 0.0
        %1928 = vmatprep.subr.mxu0 0.0
        %1929 = vmatpush1.msra.mxu0 0.0
        %1930 = vmatprep.subr.mxu0 0.0
        %1931 = vmatpush1.msra.mxu0 0.0
        %1932 = vmatprep.subr.mxu0 0.0
        %1933 = vmatpush1.msra.mxu0 0.0
        %1934 = vmatprep.subr.mxu0 0.0
        %1935 = vmatpush1.msra.mxu0 0.0
        %1936 = vmatprep.subr.mxu0 0.0
        %1937 = vmatpush1.msra.mxu0 0.0
        %1938 = vmatprep.subr.mxu0 0.0
        %1939 = vmatpush1.msra.mxu0 0.0
        %1940 = vmatprep.subr.mxu0 0.0
        %1941 = vmatpush1.msra.mxu0 0.0
        %1942 = vmatprep.subr.mxu0 0.0
        %1943 = vmatpush1.msra.mxu0 0.0
        %1944 = vmatprep.subr.mxu0 0.0
        %1945 = vmatpush1.msra.mxu0 0.0
        %1946 = vmatprep.subr.mxu0 0.0
        %1947 = vmatpush1.msra.mxu0 0.0
        %1948 = vmatprep.subr.mxu0 0.0
        %1949 = vmatpush1.msra.mxu0 0.0
        %1950 = vmatprep.subr.mxu0 0.0
        %1951 = vmatpush1.msra.mxu0 0.0
        %1952 = vmatprep.subr.mxu0 0.0
        %1953 = vmatpush1.msra.mxu0 0.0
        %1954 = vmatprep.subr.mxu0 0.0
        %1955 = vmatpush1.msra.mxu0 0.0
        %1956 = vmatprep.subr.mxu0 0.0
        %1957 = vmatpush1.msra.mxu0 0.0
        %1958 = vmatprep.subr.mxu0 0.0
        %1959 = vmatpush1.msra.mxu0 0.0
        %1960 = vmatprep.subr.mxu0 0.0
        %1961 = vmatpush1.msra.mxu0 0.0
        %1962 = vmatprep.subr.mxu0 0.0
        %1963 = vmatpush1.msra.mxu0 0.0
        %1964 = vmatprep.subr.mxu0 0.0
        %1965 = vmatpush1.msra.mxu0 0.0
        %1966 = vmatprep.mubr.f32.mxu0 0.0
        %1967 = vmatmul.mubr.f32.gmra.mrb[0].mxu0 %v1900
        %v1968 = vpop.f32.mrb[0].mxu0
        %v1969 = vadd.f32 0.0, %v1968
        %v1970 = vpop.f32.mrb[0].mxu0
        %1971 = vdwg.mxu0
        %v1972 = vadd.f32 %v587, %v1750
        %v1973 = vadd.f32 %v592, %v1823
        %v1974 = vadd.f32 %v597, %v1896
        %v1975 = vadd.f32 %v602, %v1969
        %v1976 = vtanh.pop %v1972
        %v1977 = vtanh.pop %v1973
        %v1978 = vtanh.pop %v1974
        %v1979 = vtanh.pop %v1975
        %v1981 = vlaneseq
        %v1982 = vshrl.u32 %v1981, 7
        %v1983 = vsub.s32 0, %v1982
        %v1984 = vrot.slane %v408, %v1983
        %v1986 = vmul.f32 %v1671, %v1984
        %v1987 = vmul.f32 %v1672, %v1984
        %v1988 = vmul.f32 %v1673, %v1984
        %v1989 = vmul.f32 %v1674, %v1984
        %v1990 = vmul.f32 %v1675, %v1984
        %v1991 = vmul.f32 %v1676, %v1984
        %v1992 = vmul.f32 %v1677, %v1984
        %v1993 = vmul.f32 %v1678, %v1984
        %vm1994 = vcmask 244736
        %v1995 = vsel %vm1994, %v1986, 0.0
        %1996 = vadd.xlane.f32.xlu0 %v1995
        %v1997 = vpop.xlane.xlu0 %1996
        %v1998 = vsel %vm1994, %v1987, 0.0
        %1999 = vadd.xlane.f32.xlu0 %v1998
        %v2000 = vpop.xlane.xlu0 %1999
        %v2001 = vsel %vm1994, %v1988, 0.0
        %2002 = vadd.xlane.f32.xlu0 %v2001
        %v2003 = vpop.xlane.xlu0 %2002
        %v2004 = vsel %vm1994, %v1989, 0.0
        %2005 = vadd.xlane.f32.xlu0 %v2004
        %v2006 = vpop.xlane.xlu0 %2005
        %v2007 = vsel %vm1994, %v1990, 0.0
        %2008 = vadd.xlane.f32.xlu0 %v2007
        %v2009 = vpop.xlane.xlu0 %2008
        %v2010 = vsel %vm1994, %v1991, 0.0
        %2011 = vadd.xlane.f32.xlu0 %v2010
        %v2012 = vpop.xlane.xlu0 %2011
        %v2013 = vsel %vm1994, %v1992, 0.0
        %2014 = vadd.xlane.f32.xlu0 %v2013
        %v2015 = vpop.xlane.xlu0 %2014
        %v2016 = vsel %vm1994, %v1993, 0.0
        %2017 = vadd.xlane.f32.xlu0 %v2016
        %v2018 = vpop.xlane.xlu0 %2017
        %v2020 = vlaneseq
        %v2021 = vshrl.u32 %v2020, 7
        %v2022 = vsub.s32 0, %v2021
        %v2023 = vrot.slane %v409, %v2022
        %v2025 = vmul.f32 %v1976, %v2023
        %v2026 = vmul.f32 %v1977, %v2023
        %v2027 = vmul.f32 %v1978, %v2023
        %v2028 = vmul.f32 %v1979, %v2023
        %v2029 = vsel %vm1994, %v2025, 0.0
        %2030 = vadd.xlane.f32.xlu0 %v2029
        %v2031 = vpop.xlane.xlu0 %2030
        %v2032 = vsel %vm1994, %v2026, 0.0
        %2033 = vadd.xlane.f32.xlu0 %v2032
        %v2034 = vpop.xlane.xlu0 %2033
        %v2035 = vsel %vm1994, %v2027, 0.0
        %2036 = vadd.xlane.f32.xlu0 %v2035
        %v2037 = vpop.xlane.xlu0 %2036
        %v2038 = vsel %vm1994, %v2028, 0.0
        %2039 = vadd.xlane.f32.xlu0 %v2038
        %v2040 = vpop.xlane.xlu0 %2039
        %v2049 = vlaneseq
        %v2050 = vand.u32 %v2049, 127
        %v2051 = vlaneseq
        %v2052 = vshrl.u32 %v2051, 7
        %v2053 = vsub.s32 %v2050, %v2052
        %v2054 = vrot.slane %v1997, %v2053
        %v2055 = vadd.s32 %v2050, 4294967288
        %v2056 = vlaneseq
        %v2057 = vshrl.u32 %v2056, 7
        %v2058 = vsub.s32 %v2055, %v2057
        %v2059 = vrot.slane %v2000, %v2058
        %vm2060 = vcmask 130112
        %v2061 = vsel %vm2060, %v2059, %v2054
        %v2062 = vlaneseq
        %v2063 = vshrl.u32 %v2062, 7
        %v2064 = vsub.s32 %v2050, %v2063
        %v2065 = vrot.slane %v2003, %v2064
        %v2066 = vlaneseq
        %v2067 = vshrl.u32 %v2066, 7
        %v2068 = vsub.s32 %v2055, %v2067
        %v2069 = vrot.slane %v2006, %v2068
        %v2070 = vsel %vm2060, %v2069, %v2065
        %v2071 = vlaneseq
        %v2072 = vshrl.u32 %v2071, 7
        %v2073 = vsub.s32 %v2050, %v2072
        %v2074 = vrot.slane %v2009, %v2073
        %v2075 = vlaneseq
        %v2076 = vshrl.u32 %v2075, 7
        %v2077 = vsub.s32 %v2055, %v2076
        %v2078 = vrot.slane %v2012, %v2077
        %v2079 = vsel %vm2060, %v2078, %v2074
        %v2080 = vlaneseq
        %v2081 = vshrl.u32 %v2080, 7
        %v2082 = vsub.s32 %v2050, %v2081
        %v2083 = vrot.slane %v2015, %v2082
        %v2084 = vlaneseq
        %v2085 = vshrl.u32 %v2084, 7
        %v2086 = vsub.s32 %v2055, %v2085
        %v2087 = vrot.slane %v2018, %v2086
        %v2088 = vsel %vm2060, %v2087, %v2083
        %vm2089 = vcmask 1041409
        %v2090 = vsel %vm2089, %v2070, %v2061
        %vm2091 = vcmask 1042434
        %v2092 = vsel %vm2091, %v2079, %v2090
        %vm2093 = vcmask 1043459
        %v2094 = vsel %vm2093, %v2088, %v2092
        %vm2096 = vcmask 125952
        %v2097 = vsel %vm2096, %v2094, -inf
        %2098 = vmax.xlane.f32.xlu0 %v2097
        %v2099 = vpop.xlane.xlu0 %2098
        %v2101 = vlaneseq
        %v2102 = vshrl.u32 %v2101, 7
        %v2103 = vsub.s32 0, %v2102
        %v2104 = vrot.slane %v2099, %v2103
        %v2105 = vlaneseq
        %v2106 = vshrl.u32 %v2105, 7
        %v2107 = vsub.s32 1, %v2106
        %v2108 = vrot.slane %v2099, %v2107
        %v2109 = vlaneseq
        %v2110 = vshrl.u32 %v2109, 7
        %v2111 = vsub.s32 2, %v2110
        %v2112 = vrot.slane %v2099, %v2111
        %v2113 = vlaneseq
        %v2114 = vshrl.u32 %v2113, 7
        %v2115 = vsub.s32 3, %v2114
        %v2116 = vrot.slane %v2099, %v2115
        %v2121 = vsub.f32 %v1997, %v2104
        %v2122 = vsub.f32 %v2000, %v2104
        %v2123 = vsub.f32 %v2003, %v2108
        %v2124 = vsub.f32 %v2006, %v2108
        %v2125 = vsub.f32 %v2009, %v2112
        %v2126 = vsub.f32 %v2012, %v2112
        %v2127 = vsub.f32 %v2015, %v2116
        %v2128 = vsub.f32 %v2018, %v2116
        %v2129 = vmul.f32 %v2121, 1.442695
        %v2130 = vpow.pop %v2129
        %v2131 = vmul.f32 %v2122, 1.442695
        %v2132 = vpow.pop %v2131
        %v2133 = vmul.f32 %v2123, 1.442695
        %v2134 = vpow.pop %v2133
        %v2135 = vmul.f32 %v2124, 1.442695
        %v2136 = vpow.pop %v2135
        %v2137 = vmul.f32 %v2125, 1.442695
        %v2138 = vpow.pop %v2137
        %v2139 = vmul.f32 %v2126, 1.442695
        %v2140 = vpow.pop %v2139
        %v2141 = vmul.f32 %v2127, 1.442695
        %v2142 = vpow.pop %v2141
        %v2143 = vmul.f32 %v2128, 1.442695
        %v2144 = vpow.pop %v2143
        %2153 = vset.pattern.permute.xlu0 0
        %2154 = vperm.xlu0 %2153, %v2130
        %v2155 = vpop.permute.xlu0 %2154
        %2156 = vset.pattern.permute.xlu0 0
        %2157 = vperm.xlu0 %2156, %v2132
        %v2158 = vpop.permute.xlu0 %2157
        %2159 = vset.pattern.permute.xlu0 0
        %2160 = vperm.xlu0 %2159, %v2134
        %v2161 = vpop.permute.xlu0 %2160
        %2162 = vset.pattern.permute.xlu0 0
        %2163 = vperm.xlu0 %2162, %v2136
        %v2164 = vpop.permute.xlu0 %2163
        %2165 = vset.pattern.permute.xlu0 0
        %2166 = vperm.xlu0 %2165, %v2138
        %v2167 = vpop.permute.xlu0 %2166
        %2168 = vset.pattern.permute.xlu0 0
        %2169 = vperm.xlu0 %2168, %v2140
        %v2170 = vpop.permute.xlu0 %2169
        %2171 = vset.pattern.permute.xlu0 0
        %2172 = vperm.xlu0 %2171, %v2142
        %v2173 = vpop.permute.xlu0 %2172
        %2174 = vset.pattern.permute.xlu0 0
        %2175 = vperm.xlu0 %2174, %v2144
        %v2176 = vpop.permute.xlu0 %2175
        %v2177 = vlaneseq
        %v2178 = vshrl.u32 %v2177, 7
        %v2179 = vsub.s32 %v2050, %v2178
        %v2180 = vrot.slane %v2155, %v2179
        %v2181 = vlaneseq
        %v2182 = vshrl.u32 %v2181, 7
        %v2183 = vsub.s32 %v2055, %v2182
        %v2184 = vrot.slane %v2158, %v2183
        %v2185 = vsel %vm2060, %v2184, %v2180
        %v2186 = vlaneseq
        %v2187 = vshrl.u32 %v2186, 7
        %v2188 = vsub.s32 %v2050, %v2187
        %v2189 = vrot.slane %v2161, %v2188
        %v2190 = vlaneseq
        %v2191 = vshrl.u32 %v2190, 7
        %v2192 = vsub.s32 %v2055, %v2191
        %v2193 = vrot.slane %v2164, %v2192
        %v2194 = vsel %vm2060, %v2193, %v2189
        %v2195 = vlaneseq
        %v2196 = vshrl.u32 %v2195, 7
        %v2197 = vsub.s32 %v2050, %v2196
        %v2198 = vrot.slane %v2167, %v2197
        %v2199 = vlaneseq
        %v2200 = vshrl.u32 %v2199, 7
        %v2201 = vsub.s32 %v2055, %v2200
        %v2202 = vrot.slane %v2170, %v2201
        %v2203 = vsel %vm2060, %v2202, %v2198
        %v2204 = vlaneseq
        %v2205 = vshrl.u32 %v2204, 7
        %v2206 = vsub.s32 %v2050, %v2205
        %v2207 = vrot.slane %v2173, %v2206
        %v2208 = vlaneseq
        %v2209 = vshrl.u32 %v2208, 7
        %v2210 = vsub.s32 %v2055, %v2209
        %v2211 = vrot.slane %v2176, %v2210
        %v2212 = vsel %vm2060, %v2211, %v2207
        %v2213 = vsel %vm2089, %v2194, %v2185
        %v2214 = vsel %vm2091, %v2203, %v2213
        %v2215 = vsel %vm2093, %v2212, %v2214
        %v2217 = vsel %vm2096, %v2215, 0.0
        %2218 = vadd.xlane.f32.xlu0 %v2217
        %v2219 = vpop.xlane.xlu0 %2218
        %v2220 = vrcp.pop %v2219
        %v2222 = vlaneseq
        %v2223 = vshrl.u32 %v2222, 7
        %v2224 = vsub.s32 0, %v2223
        %v2225 = vrot.slane %v2220, %v2224
        %v2226 = vlaneseq
        %v2227 = vshrl.u32 %v2226, 7
        %v2228 = vsub.s32 1, %v2227
        %v2229 = vrot.slane %v2220, %v2228
        %v2230 = vlaneseq
        %v2231 = vshrl.u32 %v2230, 7
        %v2232 = vsub.s32 2, %v2231
        %v2233 = vrot.slane %v2220, %v2232
        %v2234 = vlaneseq
        %v2235 = vshrl.u32 %v2234, 7
        %v2236 = vsub.s32 3, %v2235
        %v2237 = vrot.slane %v2220, %v2236
        %v2242 = vmul.f32 %v2130, %v2225
        %v2243 = vmul.f32 %v2132, %v2225
        %v2244 = vmul.f32 %v2134, %v2229
        %v2245 = vmul.f32 %v2136, %v2229
        %v2246 = vmul.f32 %v2138, %v2233
        %v2247 = vmul.f32 %v2140, %v2233
        %v2248 = vmul.f32 %v2142, %v2237
        %v2249 = vmul.f32 %v2144, %v2237
        %v2254 = vlaneseq
        %v2255 = vshrl.u32 %v2254, 7
        %v2256 = vsub.s32 %v2050, %v2255
        %v2257 = vrot.slane %v2031, %v2256
        %v2258 = vlaneseq
        %v2259 = vshrl.u32 %v2258, 7
        %v2260 = vsub.s32 %v2050, %v2259
        %v2261 = vrot.slane %v2034, %v2260
        %v2262 = vlaneseq
        %v2263 = vshrl.u32 %v2262, 7
        %v2264 = vsub.s32 %v2050, %v2263
        %v2265 = vrot.slane %v2037, %v2264
        %v2266 = vlaneseq
        %v2267 = vshrl.u32 %v2266, 7
        %v2268 = vsub.s32 %v2050, %v2267
        %v2269 = vrot.slane %v2040, %v2268
        %v2270 = vsel %vm2089, %v2261, %v2257
        %v2271 = vsel %vm2091, %v2265, %v2270
        %v2272 = vsel %vm2093, %v2269, %v2271
        %vm2274 = vcmask 60416
        %v2275 = vsel %vm2274, %v2272, -inf
        %2276 = vmax.xlane.f32.xlu0 %v2275
        %v2277 = vpop.xlane.xlu0 %2276
        %v2279 = vlaneseq
        %v2280 = vshrl.u32 %v2279, 7
        %v2281 = vsub.s32 0, %v2280
        %v2282 = vrot.slane %v2277, %v2281
        %v2283 = vlaneseq
        %v2284 = vshrl.u32 %v2283, 7
        %v2285 = vsub.s32 1, %v2284
        %v2286 = vrot.slane %v2277, %v2285
        %v2287 = vlaneseq
        %v2288 = vshrl.u32 %v2287, 7
        %v2289 = vsub.s32 2, %v2288
        %v2290 = vrot.slane %v2277, %v2289
        %v2291 = vlaneseq
        %v2292 = vshrl.u32 %v2291, 7
        %v2293 = vsub.s32 3, %v2292
        %v2294 = vrot.slane %v2277, %v2293
        %v2299 = vsub.f32 %v2031, %v2282
        %v2300 = vsub.f32 %v2034, %v2286
        %v2301 = vsub.f32 %v2037, %v2290
        %v2302 = vsub.f32 %v2040, %v2294
        %v2303 = vmul.f32 %v2299, 1.442695
        %v2304 = vpow.pop %v2303
        %v2305 = vmul.f32 %v2300, 1.442695
        %v2306 = vpow.pop %v2305
        %v2307 = vmul.f32 %v2301, 1.442695
        %v2308 = vpow.pop %v2307
        %v2309 = vmul.f32 %v2302, 1.442695
        %v2310 = vpow.pop %v2309
        %2315 = vset.pattern.permute.xlu0 0
        %2316 = vperm.xlu0 %2315, %v2304
        %v2317 = vpop.permute.xlu0 %2316
        %2318 = vset.pattern.permute.xlu0 0
        %2319 = vperm.xlu0 %2318, %v2306
        %v2320 = vpop.permute.xlu0 %2319
        %2321 = vset.pattern.permute.xlu0 0
        %2322 = vperm.xlu0 %2321, %v2308
        %v2323 = vpop.permute.xlu0 %2322
        %2324 = vset.pattern.permute.xlu0 0
        %2325 = vperm.xlu0 %2324, %v2310
        %v2326 = vpop.permute.xlu0 %2325
        %v2327 = vlaneseq
        %v2328 = vshrl.u32 %v2327, 7
        %v2329 = vsub.s32 %v2050, %v2328
        %v2330 = vrot.slane %v2317, %v2329
        %v2331 = vlaneseq
        %v2332 = vshrl.u32 %v2331, 7
        %v2333 = vsub.s32 %v2050, %v2332
        %v2334 = vrot.slane %v2320, %v2333
        %v2335 = vlaneseq
        %v2336 = vshrl.u32 %v2335, 7
        %v2337 = vsub.s32 %v2050, %v2336
        %v2338 = vrot.slane %v2323, %v2337
        %v2339 = vlaneseq
        %v2340 = vshrl.u32 %v2339, 7
        %v2341 = vsub.s32 %v2050, %v2340
        %v2342 = vrot.slane %v2326, %v2341
        %v2343 = vsel %vm2089, %v2334, %v2330
        %v2344 = vsel %vm2091, %v2338, %v2343
        %v2345 = vsel %vm2093, %v2342, %v2344
        %v2347 = vsel %vm2274, %v2345, 0.0
        %2348 = vadd.xlane.f32.xlu0 %v2347
        %v2349 = vpop.xlane.xlu0 %2348
        %v2350 = vrcp.pop %v2349
        %v2352 = vlaneseq
        %v2353 = vshrl.u32 %v2352, 7
        %v2354 = vsub.s32 0, %v2353
        %v2355 = vrot.slane %v2350, %v2354
        %v2356 = vlaneseq
        %v2357 = vshrl.u32 %v2356, 7
        %v2358 = vsub.s32 1, %v2357
        %v2359 = vrot.slane %v2350, %v2358
        %v2360 = vlaneseq
        %v2361 = vshrl.u32 %v2360, 7
        %v2362 = vsub.s32 2, %v2361
        %v2363 = vrot.slane %v2350, %v2362
        %v2364 = vlaneseq
        %v2365 = vshrl.u32 %v2364, 7
        %v2366 = vsub.s32 3, %v2365
        %v2367 = vrot.slane %v2350, %v2366
        %v2372 = vmul.f32 %v2304, %v2355
        %v2373 = vmul.f32 %v2306, %v2359
        %v2374 = vmul.f32 %v2308, %v2363
        %v2375 = vmul.f32 %v2310, %v2367
        %2377 = vset.pattern.permute.xlu0 0
        %2378 = vperm.xlu0 %2377, %v2372
        %v2379 = vpop.permute.xlu0 %2378
        %2382 = vset.pattern.permute.xlu0 0
        %2383 = vperm.xlu0 %2382, %v2373
        %v2384 = vpop.permute.xlu0 %2383
        %2387 = vset.pattern.permute.xlu0 0
        %2388 = vperm.xlu0 %2387, %v2374
        %v2389 = vpop.permute.xlu0 %2388
        %2392 = vset.pattern.permute.xlu0 0
        %2393 = vperm.xlu0 %2392, %v2375
        %v2394 = vpop.permute.xlu0 %2393
        %v2396 = vmul.f32 %v2379, %v384
        %v2397 = vmul.f32 %v2384, %v385
        %v2398 = vmul.f32 %v2389, %v386
        %v2399 = vmul.f32 %v2394, %v387
        %v2400 = vsel %vm410, %v2396, 0.0
        %v2401 = vrot.slane %v2400, 4
        %v2402 = vadd.f32 %v2400, %v2401
        %v2403 = vrot.slane %v2402, 2
        %v2404 = vadd.f32 %v2402, %v2403
        %v2405 = vrot.slane %v2404, 1
        %v2406 = vadd.f32 %v2404, %v2405
        %v2407 = vsel %vm410, %v2397, 0.0
        %v2408 = vrot.slane %v2407, 4
        %v2409 = vadd.f32 %v2407, %v2408
        %v2410 = vrot.slane %v2409, 2
        %v2411 = vadd.f32 %v2409, %v2410
        %v2412 = vrot.slane %v2411, 1
        %v2413 = vadd.f32 %v2411, %v2412
        %v2414 = vsel %vm410, %v2398, 0.0
        %v2415 = vrot.slane %v2414, 4
        %v2416 = vadd.f32 %v2414, %v2415
        %v2417 = vrot.slane %v2416, 2
        %v2418 = vadd.f32 %v2416, %v2417
        %v2419 = vrot.slane %v2418, 1
        %v2420 = vadd.f32 %v2418, %v2419
        %v2421 = vsel %vm410, %v2399, 0.0
        %v2422 = vrot.slane %v2421, 4
        %v2423 = vadd.f32 %v2421, %v2422
        %v2424 = vrot.slane %v2423, 2
        %v2425 = vadd.f32 %v2423, %v2424
        %v2426 = vrot.slane %v2425, 1
        %v2427 = vadd.f32 %v2425, %v2426
        %2429 = vset.pattern.permute.xlu0 0
        %2430 = vperm.xlu0 %2429, %v2242
        %v2431 = vpop.permute.xlu0 %2430
        %2434 = vset.pattern.permute.xlu0 0
        %2435 = vperm.xlu0 %2434, %v2243
        %v2436 = vpop.permute.xlu0 %2435
        %2439 = vset.pattern.permute.xlu0 0
        %2440 = vperm.xlu0 %2439, %v2244
        %v2441 = vpop.permute.xlu0 %2440
        %2444 = vset.pattern.permute.xlu0 0
        %2445 = vperm.xlu0 %2444, %v2245
        %v2446 = vpop.permute.xlu0 %2445
        %2449 = vset.pattern.permute.xlu0 0
        %2450 = vperm.xlu0 %2449, %v2246
        %v2451 = vpop.permute.xlu0 %2450
        %2454 = vset.pattern.permute.xlu0 0
        %2455 = vperm.xlu0 %2454, %v2247
        %v2456 = vpop.permute.xlu0 %2455
        %2459 = vset.pattern.permute.xlu0 0
        %2460 = vperm.xlu0 %2459, %v2248
        %v2461 = vpop.permute.xlu0 %2460
        %2464 = vset.pattern.permute.xlu0 0
        %2465 = vperm.xlu0 %2464, %v2249
        %v2466 = vpop.permute.xlu0 %2465
        %v2468 = vmul.f32 %v2431, %v388
        %v2469 = vmul.f32 %v2436, %v389
        %v2470 = vmul.f32 %v2441, %v390
        %v2471 = vmul.f32 %v2446, %v391
        %v2472 = vmul.f32 %v2451, %v392
        %v2473 = vmul.f32 %v2456, %v393
        %v2474 = vmul.f32 %v2461, %v394
        %v2475 = vmul.f32 %v2466, %v395
        %v2476 = vsel %vm410, %v2468, 0.0
        %v2477 = vsel %vm410, %v2469, 0.0
        %v2478 = vadd.f32 %v2476, %v2477
        %v2479 = vrot.slane %v2478, 4
        %v2480 = vadd.f32 %v2478, %v2479
        %v2481 = vrot.slane %v2480, 2
        %v2482 = vadd.f32 %v2480, %v2481
        %v2483 = vrot.slane %v2482, 1
        %v2484 = vadd.f32 %v2482, %v2483
        %v2485 = vsel %vm410, %v2470, 0.0
        %v2486 = vsel %vm410, %v2471, 0.0
        %v2487 = vadd.f32 %v2485, %v2486
        %v2488 = vrot.slane %v2487, 4
        %v2489 = vadd.f32 %v2487, %v2488
        %v2490 = vrot.slane %v2489, 2
        %v2491 = vadd.f32 %v2489, %v2490
        %v2492 = vrot.slane %v2491, 1
        %v2493 = vadd.f32 %v2491, %v2492
        %v2494 = vsel %vm410, %v2472, 0.0
        %v2495 = vsel %vm410, %v2473, 0.0
        %v2496 = vadd.f32 %v2494, %v2495
        %v2497 = vrot.slane %v2496, 4
        %v2498 = vadd.f32 %v2496, %v2497
        %v2499 = vrot.slane %v2498, 2
        %v2500 = vadd.f32 %v2498, %v2499
        %v2501 = vrot.slane %v2500, 1
        %v2502 = vadd.f32 %v2500, %v2501
        %v2503 = vsel %vm410, %v2474, 0.0
        %v2504 = vsel %vm410, %v2475, 0.0
        %v2505 = vadd.f32 %v2503, %v2504
        %v2506 = vrot.slane %v2505, 4
        %v2507 = vadd.f32 %v2505, %v2506
        %v2508 = vrot.slane %v2507, 2
        %v2509 = vadd.f32 %v2507, %v2508
        %v2510 = vrot.slane %v2509, 1
        %v2511 = vadd.f32 %v2509, %v2510
        %vm2512 = vcmask 253952
        %2513 = vst.msk [vmem:[%s380] sm:$0x1] %vm2512, %v2406
        %2514 = vst.msk [vmem:[%s380 + $0x2] sm:$0x1] %vm2512, %v2413
        %2515 = vst.msk [vmem:[%s380 + $0x4] sm:$0x1] %vm2512, %v2420
        %2516 = vst.msk [vmem:[%s380 + $0x6] sm:$0x1] %vm2512, %v2427
        %2517 = vst.msk [vmem:[%s380 + $0x1] sm:$0x1] %vm2512, %v2484
        %2518 = vst.msk [vmem:[%s380 + $0x3] sm:$0x1] %vm2512, %v2493
        %2519 = vst.msk [vmem:[%s380 + $0x5] sm:$0x1] %vm2512, %v2502
        %2520 = vst.msk [vmem:[%s380 + $0x7] sm:$0x1] %vm2512, %v2511
        %s2521 = sand.u32 %s193, 1
        %s2522 = scalar_lea.sflag [#allocation4], %s2521
        %s2523 = sand.u32 %s193, 1
        %s2524 = smul.addr %s2523, 8
        %s2525 = scalar_lea.vmem [#allocation11], %s2524
        // Predicated region
        $region69: #{tpu_custom_call.1} parent=47 // pred_check
          %p2526 = pneg %p203
        $region70: #{tpu_custom_call.1} parent=47 // pred_check_branch
          %2528 = sbr.rel (%p2526) target = $region72
        $region71: #{tpu_custom_call.1} parent=47 // pred_region
          %s2529 = smul.u32 4, %s28
          %s2531 = ssub.s32 128, 128
          %2532 = vsyncadd %s2522, %s2531
          %s2533 = smul.addr %s2529, 32
          %s2534 = scalar_lea.hbm %s7, %s2533
          %s2535 = sshll.u32 %s2525, 4
          %s2536 = int_to_ptr.vmem [resolvable:$true] %s2535
          %2541 = dma.vmem_to_hbm [thread:$0]  %s2536, 128, %s2534, %s2522, 32, 32, 2
        $region72: #{tpu_custom_call.1} parent=47 // pred_fallthru
          _
      $region48: #{tpu_custom_call.1} parent=5 // pred_fallthru
        _
      %p2542 = scmp.le.s32.totalorder 2, %s23
      // Predicated region
      $region73: #{tpu_custom_call.1} parent=5 // pred_check
        %p2543 = pneg %p2542
      $region74: #{tpu_custom_call.1} parent=5 // pred_check_branch
        %2545 = sbr.rel (%p2543) target = $region76
      $region75: #{tpu_custom_call.1} parent=5 // pred_region
        %s2546 = ssub.s32 %s23, 2
        // Predicated region
        $region77: #{tpu_custom_call.1} parent=75 // pred_check
          %p2547 = pneg %p209
        $region78: #{tpu_custom_call.1} parent=75 // pred_check_branch
          %2549 = sbr.rel (%p2547) target = $region80
        $region79: #{tpu_custom_call.1} parent=75 // pred_region
          %s2550 = sand.u32 %s194, 1
          %s2551 = scalar_lea.sflag [#allocation4], %s2550
          %s2552 = sand.u32 %s194, 1
          %s2553 = smul.addr %s2552, 8
          %s2554 = scalar_lea.vmem [#allocation11], %s2553
          %2555 = dma.done %s2551, 128
        $region80: #{tpu_custom_call.1} parent=75 // pred_fallthru
          _
      $region76: #{tpu_custom_call.1} parent=5 // pred_fallthru
        _
    $region6: #{tpu_custom_call.1} parent=1 // loop_footer
      %s27 = sadd.s32 1, %s23
    $region7: #{tpu_custom_call.1} parent=1 // loop_footer_branch
      %22 = sbr.rel target = $region3
    $region8: #{tpu_custom_call.1} parent=1 // loop_exit
      _
    %2556 = vsyncpa [#allocation3], 1
    %s2557 = scalar_lea.sflag [#allocation3], 1
    %2558 = vsyncpa %s2557, 1
    %2559 = vsyncpa [#allocation6], 1
    %s2560 = scalar_lea.sflag [#allocation6], 1
    %2561 = vsyncpa %s2560, 1
    %2562 = vsyncpa [#allocation9], 1
    %2563 = vsyncpa [#allocation4], 1
    %s2564 = scalar_lea.sflag [#allocation4], 1
    %2565 = vsyncpa %s2564, 1

</llo_original>
